<compile_context>
chip_gen: v6e
topology: v6e:2x2x1
jax: 0.10.0
libtpu: 0.0.40
codegen_flags: <defaults>
</compile_context>

<pallas_src>
from functools import partial

import jax
import jax.numpy as jnp
from jax.experimental import pallas as pl
from jax.experimental.pallas import tpu as pltpu

VMEM_SPEC = pl.BlockSpec(memory_space=pltpu.MemorySpace.VMEM)
SMEM_SPEC = pl.BlockSpec(memory_space=pltpu.MemorySpace.SMEM)

INV_TEMP = 1000.0     # 1 / gumbel-softmax temperature (temp = 0.001)


# ----------------------------- shared GRU cell ------------------------------

def _gru_cell(gi, gh, h, bhh_n, H):
    # PyTorch GRU (gate order r, z, n).  gi already contains b_ih and the
    # r,z parts of b_hh (folded at prepare_params time); gh = h @ W_hh only;
    # the n-gate part of b_hh must stay inside the r-multiplication.
    r = jax.nn.sigmoid(gi[:, 0:H] + gh[:, 0:H])
    z = jax.nn.sigmoid(gi[:, H:2 * H] + gh[:, H:2 * H])
    n = jnp.tanh(gi[:, 2 * H:3 * H] + r * (gh[:, 2 * H:3 * H] + bhh_n))
    return (1.0 - z) * n + z * h


# --------------------------- fused encode kernel ----------------------------

def _encode_fused_kernel(lens_ref, emb_ref,
                         enc_wih_ref, enc_whhf_ref, enc_whhb_ref,
                         enc_bih_ref, enc_bhhnf_ref, enc_bhhnb_ref,
                         h2l_wt_ref, h2l_b_ref, l2o_wt_ref, l2o_b_ref,
                         dec_wih_ref, dec_whh_ref, dec_bih_ref, dec_bhhn_ref,
                         o2v_wt_ref, o2v_b_ref,
                         out_ref, encf_ref, encb_ref, *, B, T):
    H = dec_whh_ref.shape[0]
    emb = emb_ref[...]                                        # (B*T, H), row = b*T + t

    # ---- bidirectional encoder GRU (time axis = B, batch = T) ----
    # One bulk matmul for the input projection of ALL timesteps (both dirs).
    gi_all = jnp.dot(emb, enc_wih_ref[...],
                     preferred_element_type=jnp.float32) + enc_bih_ref[...]   # (B*T, 6H)
    whh_f, whh_b = enc_whhf_ref[...], enc_whhb_ref[...]
    bhhn_f, bhhn_b = enc_bhhnf_ref[...], enc_bhhnb_ref[...]
    h_f = jnp.zeros((T, H), jnp.float32)
    h_b = jnp.zeros((T, H), jnp.float32)
    for s in range(B):                       # B is tiny & static: fully unrolled
        gh_f = jnp.dot(h_f, whh_f, preferred_element_type=jnp.float32)
        gh_b = jnp.dot(h_b, whh_b, preferred_element_type=jnp.float32)
        fr = slice(s * T, (s + 1) * T)
        br = slice((B - 1 - s) * T, (B - s) * T)
        h_f = _gru_cell(gi_all[fr, 0:3 * H], gh_f, h_f, bhhn_f, H)
        h_b = _gru_cell(gi_all[br, 3 * H:6 * H], gh_b, h_b, bhhn_b, H)
        encf_ref[fr, :] = h_f
        encb_ref[br, :] = h_b

    # ---- last-valid-row selection + hidden2latent + tanh + latent2output ----
    lastf_rows, lastb_rows = [], []
    for b in range(B):
        r = b * T + lens_ref[b] - 1                           # scalar (SMEM)
        lastf_rows.append(encf_ref[pl.ds(r, 1), :])
        lastb_rows.append(encb_ref[pl.ds(r, 1), :])
    lastf = jnp.concatenate(lastf_rows, axis=0)               # (B, H) fwd half
    lastb = jnp.concatenate(lastb_rows, axis=0)               # (B, H) bwd half
    h2l_wt = h2l_wt_ref[...]                                  # (2H, L)
    lat = (jnp.dot(lastf, h2l_wt[0:H, :], preferred_element_type=jnp.float32)
           + jnp.dot(lastb, h2l_wt[H:2 * H, :], preferred_element_type=jnp.float32)
           + h2l_b_ref[...])
    de_hidden = (jnp.dot(jnp.tanh(lat), l2o_wt_ref[...],
                         preferred_element_type=jnp.float32) + l2o_b_ref[...])  # (B, H)

    # ---- decoder GRU (same time-axis quirk) ----
    gi_emb = jnp.dot(emb, dec_wih_ref[...],
                     preferred_element_type=jnp.float32) + dec_bih_ref[...]     # (B*T, 3H)
    gi_de = jnp.dot(de_hidden, dec_wih_ref[...],
                    preferred_element_type=jnp.float32)                         # (B, 3H)
    whh_d, bhhn_d = dec_whh_ref[...], dec_bhhn_ref[...]
    h = jnp.zeros((T, H), jnp.float32)
    outs = []
    for s in range(B):
        gi = gi_emb[s * T:(s + 1) * T, :] + gi_de[s:s + 1, :]
        gh = jnp.dot(h, whh_d, preferred_element_type=jnp.float32)
        h = _gru_cell(gi, gh, h, bhhn_d, H)
        outs.append(h)
    dec_out = jnp.concatenate(outs, axis=0)                   # (B*T, H), row = b*T + t

    # ---- output2vocab fused in (128-lane-dense padded logits) ----
    out_ref[...] = (jnp.dot(dec_out, o2v_wt_ref[...],
                            preferred_element_type=jnp.float32) + o2v_b_ref[...])


# ------------------------- fused gate-decode kernel --------------------------

def _gate_decode_kernel(de0_ref, noise_ref, muih_ref,
                        wih_ref, whh_ref, bih_ref, bhhn_ref,
                        comb_wt_ref, comb_b_ref, din_wt_ref, din_b_ref,
                        l2o_wt_ref, l2o_b_ref, o2v_wt_ref, o2v_b_ref,
                        out_ref, mix_ref, *, T, B, E):
    H = whh_ref.shape[0]
    de0 = de0_ref[...]
    wih, whh = wih_ref[...], whh_ref[...]
    bih, bhhn = bih_ref[...], bhhn_ref[...]
    comb_wt, comb_b = comb_wt_ref[...], comb_b_ref[...]

    # Loop-invariant: de0 through the three tied word projections (+ input_* biases).
    din = jnp.dot(de0, din_wt_ref[...],
                  preferred_element_type=jnp.float32) + din_b_ref[...]           # (B, 3E)

    # Hoisted latent2output of the gate candidates [misc | item | item+user];
    # exact because the softmax gate weights sum to 1 (bias distributes).
    u_all = jnp.dot(muih_ref[...], l2o_wt_ref[...],
                    preferred_element_type=jnp.float32) + l2o_b_ref[...]          # (3B, E)
    u0, u1, u2 = u_all[0:B], u_all[B:2 * B], u_all[2 * B:3 * B]

    inp = de0
    uih = u2                 # initial user_item_hidden_i = latent2output(user + item)
    h = jnp.zeros((B, H), jnp.float32)

    for t in range(T):                       # small static T: fully unrolled
        x = inp + uih
        gi = jnp.dot(x, wih, preferred_element_type=jnp.float32) + bih
        gh = jnp.dot(h, whh, preferred_element_type=jnp.float32)
        h = _gru_cell(gi, gh, h, bhhn, H)

        # One 128-lane matmul for [general|item|aspect|de_gate] projections of h.
        proj = jnp.dot(h, comb_wt, preferred_element_type=jnp.float32) + comb_b   # (B, Pc)

        # Gumbel-softmax gate; temp folded (noise pre-scaled by 1/temp outside).
        y = proj[:, 3 * E:3 * E + 3] * INV_TEMP + noise_ref[t]
        m = jnp.max(y, axis=-1, keepdims=True)
        e = jnp.exp(y - m)
        gate = e * pl.reciprocal(jnp.sum(e, axis=-1, keepdims=True), approx=True)
        g0, g1, g2 = gate[:, 0:1], gate[:, 1:2], gate[:, 2:3]

        mix = (g0 * proj[:, 0:E] + g1 * proj[:, E:2 * E] + g2 * proj[:, 2 * E:3 * E])
        for b in range(B):                   # store in consumer (b-major) row order
            mix_ref[b * T + t:b * T + t + 1, :] = mix[b:b + 1, :]

        inp = g0 * din[:, 0:E] + g1 * din[:, E:2 * E] + g2 * din[:, 2 * E:3 * E]
        uih = g0 * u0 + g1 * u1 + g2 * u2    # pure VPU; l2o matmul hoisted

    # output2vocab fused: one big matmul, 128-lane-dense padded logits.
    out_ref[...] = (jnp.dot(mix_ref[...], o2v_wt_ref[...],
                            preferred_element_type=jnp.float32) + o2v_b_ref[...])


# ------------------------------- parameters ---------------------------------

def init_params(key, V, U, I, E, H, L):
    assert E == H, "original model wiring requires embedding_size == hidden_size"
    ks = iter(jax.random.split(key, 64))

    def w(shape, scale=0.1):
        return jax.random.normal(next(ks), shape, jnp.float32) * scale

    p = {}
    p['embedding'] = w((V, E), 1.0)                       # shared nn.Embedding
    p['user_embedding'] = jnp.zeros((U, L), jnp.float32)  # .fill_(0)
    p['item_embedding'] = jnp.zeros((I, L), jnp.float32)  # .fill_(0)
    p['output2vocab_w'] = w((V, H)); p['output2vocab_b'] = w((V,))

    # _ENCODER: bidirectional GRU(H -> H), 1 layer
    for d in ('f', 'b'):
        p[f'enc_w_ih_{d}'] = w((3 * H, H)); p[f'enc_w_hh_{d}'] = w((3 * H, H))
        p[f'enc_b_ih_{d}'] = w((3 * H,));   p[f'enc_b_hh_{d}'] = w((3 * H,))
    p['enc_h2l_w'] = w((L, 2 * H)); p['enc_h2l_b'] = w((L,))

    # _DECODER
    p['dec_l2o_w'] = w((E, L)); p['dec_l2o_b'] = w((E,))
    p['dec_w_ih'] = w((3 * H, H)); p['dec_w_hh'] = w((3 * H, H))
    p['dec_b_ih'] = w((3 * H,));   p['dec_b_hh'] = w((3 * H,))

    # _GEN_NETWORK (de_strategy == 'gate')
    p['misc_embedding'] = jnp.zeros((L,), jnp.float32)    # nn.Parameter(zeros(L))
    p['gen_l2o_w'] = w((E, L)); p['gen_l2o_b'] = w((E,))
    p['gen_w_ih'] = w((3 * H, E)); p['gen_w_hh'] = w((3 * H, H))
    p['gen_b_ih'] = w((3 * H,));   p['gen_b_hh'] = w((3 * H,))
    p['de_gate_w'] = w((3, H)); p['de_gate_b'] = w((3,))
    for name in ('general', 'item', 'aspect'):
        p[f'out_{name}_w'] = w((E, E))   # weight TIED between output_* and input_*
        p[f'out_{name}_b'] = w((E,))
        p[f'in_{name}_b'] = w((E,))
    return p


def _fold_gru_bias(b_ih, b_hh, H):
    """Fold the r,z parts of b_hh into b_ih (exact); keep the n-gate part."""
    bih_fold = jnp.concatenate([b_ih[:2 * H] + b_hh[:2 * H], b_ih[2 * H:3 * H]])
    return bih_fold.reshape(1, 3 * H), b_hh[2 * H:3 * H].reshape(1, H)


def prepare_params(p):
    """One-time derivation of pre-transposed / fused / folded / padded weights."""
    q = {}
    q['embedding'] = p['embedding']
    q['user_embedding'] = p['user_embedding']
    q['item_embedding'] = p['item_embedding']
    q['misc_embedding'] = p['misc_embedding']

    V, H = p['output2vocab_w'].shape
    Vp = ((V + 127) // 128) * 128
    q['o2v_wt_pad'] = jnp.pad(p['output2vocab_w'].T, ((0, 0), (0, Vp - V)))  # (H, Vp)
    q['o2v_b_pad'] = jnp.pad(p['output2vocab_b'], (0, Vp - V)).reshape(1, Vp)
    q['o2v_b'] = p['output2vocab_b'].reshape(1, V)        # kept for static V introspection

    # Encoder bidirectional GRU: concat fwd/bwd input weights (6H-wide bulk matmul),
    # SEPARATE recurrent weights per direction (no zero-padded block-diag / no concat).
    q['enc_wih_t'] = jnp.concatenate([p['enc_w_ih_f'].T, p['enc_w_ih_b'].T], axis=1)  # (H,6H)
    q['enc_whhf_t'] = p['enc_w_hh_f'].T                   # (H, 3H)
    q['enc_whhb_t'] = p['enc_w_hh_b'].T
    bih_f, bhhn_f = _fold_gru_bias(p['enc_b_ih_f'], p['enc_b_hh_f'], H)
    bih_b, bhhn_b = _fold_gru_bias(p['enc_b_ih_b'], p['enc_b_hh_b'], H)
    q['enc_bih'] = jnp.concatenate([bih_f, bih_b], axis=1)          # (1, 6H)
    q['enc_bhhn_f'] = bhhn_f
    q['enc_bhhn_b'] = bhhn_b

    q['enc_h2l_wt'] = p['enc_h2l_w'].T                    # (2H, L)
    q['enc_h2l_b'] = p['enc_h2l_b'].reshape(1, -1)
    q['dec_l2o_wt'] = p['dec_l2o_w'].T                    # (L, E)
    q['dec_l2o_b'] = p['dec_l2o_b'].reshape(1, -1)

    q['dec_wih_t'] = p['dec_w_ih'].T
    q['dec_whh_t'] = p['dec_w_hh'].T
    q['dec_bih'], q['dec_bhhn'] = _fold_gru_bias(p['dec_b_ih'], p['dec_b_hh'], H)

    # Gate decoder GRU
    q['gen_wih_t'] = p['gen_w_ih'].T
    q['gen_whh_t'] = p['gen_w_hh'].T
    q['gen_bih'], q['gen_bhhn'] = _fold_gru_bias(p['gen_b_ih'], p['gen_b_hh'], H)
    q['gen_l2o_wt'] = p['gen_l2o_w'].T
    q['gen_l2o_b'] = p['gen_l2o_b'].reshape(1, -1)

    # Fuse [general|item|aspect|de_gate] into one weight, pad lanes to 128 multiple.
    E = p['out_general_w'].shape[0]
    out_cat_wt = jnp.concatenate(
        [p['out_general_w'].T, p['out_item_w'].T, p['out_aspect_w'].T], axis=1)  # (E, 3E)
    comb_wt = jnp.concatenate([out_cat_wt, p['de_gate_w'].T], axis=1)            # (E, 3E+3)
    comb_b = jnp.concatenate(
        [p['out_general_b'], p['out_item_b'], p['out_aspect_b'], p['de_gate_b']]).reshape(1, -1)
    Pc = ((3 * E + 3 + 127) // 128) * 128
    q['comb_wt_pad'] = jnp.pad(comb_wt, ((0, 0), (0, Pc - (3 * E + 3))))
    q['comb_b_pad'] = jnp.pad(comb_b, ((0, 0), (0, Pc - (3 * E + 3))))
    q['din_wt'] = out_cat_wt                              # tied weights for input_*
    q['din_b'] = jnp.concatenate(
        [p['in_general_b'], p['in_item_b'], p['in_aspect_b']]).reshape(1, -1)
    return q


# ------------------------------ forward passes -------------------------------

def encode_forward(params, reviews, review_lens):
    # _ENC_NETWORK: encoder -> decoder -> output2vocab, fully fused in ONE kernel.
    emb = params['embedding'][reviews]                    # (B, T, H)
    B, T, H = emb.shape
    Vp = params['o2v_wt_pad'].shape[1]
    V = params['o2v_b'].shape[1]

    logits_pad = pl.pallas_call(
        partial(_encode_fused_kernel, B=B, T=T),
        out_shape=jax.ShapeDtypeStruct((B * T, Vp), jnp.float32),
        in_specs=[SMEM_SPEC] + [VMEM_SPEC] * 17,
        out_specs=VMEM_SPEC,
        scratch_shapes=[pltpu.VMEM((B * T, H), jnp.float32),   # fwd encoder outputs
                        pltpu.VMEM((B * T, H), jnp.float32)],  # bwd encoder outputs
    )(review_lens.astype(jnp.int32), emb.reshape(B * T, H),
      params['enc_wih_t'], params['enc_whhf_t'], params['enc_whhb_t'],
      params['enc_bih'], params['enc_bhhn_f'], params['enc_bhhn_b'],
      params['enc_h2l_wt'], params['enc_h2l_b'],
      params['dec_l2o_wt'], params['dec_l2o_b'],
      params['dec_wih_t'], params['dec_whh_t'], params['dec_bih'], params['dec_bhhn'],
      params['o2v_wt_pad'], params['o2v_b_pad'])
    return logits_pad[:, :V]                              # (B*T, V)


def decode_forward(params, reviews, user_ids, item_ids, gumbel_noise):
    # _GEN_NETWORK with de_strategy == 'gate', fully fused in ONE kernel.
    emb = params['embedding'][reviews]                    # (B, T, E)
    B, T, E = emb.shape
    de0 = emb[:, 0, :]                                    # only step-0 embedding is used
    user_h = params['user_embedding'][user_ids]           # (B, L)
    item_h = params['item_embedding'][item_ids]           # (B, L)
    misc = jnp.broadcast_to(params['misc_embedding'], user_h.shape)
    # Candidate latents for the per-step gate mix: [misc | item | item+user].
    muih = jnp.concatenate([misc, item_h, item_h + user_h], axis=0)   # (3B, L)
    noise_scaled = gumbel_noise * INV_TEMP                # temp folded outside kernel

    Vp = params['o2v_wt_pad'].shape[1]
    V = params['o2v_b'].shape[1]

    logits_pad = pl.pallas_call(
        partial(_gate_decode_kernel, T=T, B=B, E=E),
        out_shape=jax.ShapeDtypeStruct((B * T, Vp), jnp.float32),
        in_specs=[VMEM_SPEC] * 15,
        out_specs=VMEM_SPEC,
        scratch_shapes=[pltpu.VMEM((B * T, E), jnp.float32)],   # mixed outputs (b-major)
    )(de0, noise_scaled, muih,
      params['gen_wih_t'], params['gen_whh_t'], params['gen_bih'], params['gen_bhhn'],
      params['comb_wt_pad'], params['comb_b_pad'], params['din_wt'], params['din_b'],
      params['gen_l2o_wt'], params['gen_l2o_b'],
      params['o2v_wt_pad'], params['o2v_b_pad'])
    return logits_pad[:, :V]                              # (B*T, V)


_encode_jit = jax.jit(encode_forward)
_decode_jit = jax.jit(decode_forward)


def network_forward(params, reviews, review_lens, user_ids, item_ids,
                    random_flag, forward_flag, gumbel_noise):
    if forward_flag == 'encode':
        return _encode_jit(params, reviews, review_lens)
    elif forward_flag == 'decode':
        return _decode_jit(params, reviews, user_ids, item_ids, gumbel_noise)
    return None


# ---------------------------------- main -------------------------------------

if __name__ == "__main__":
    V, U, I = 50, 6, 7          # vocab / user / item sizes
    E = H = 32                  # embedding_size == hidden_size (required by wiring)
    L = 16                      # latent_size
    B, T = 2, 8                 # batch, sequence length

    key = jax.random.PRNGKey(0)
    pkey, tkey, gkey = jax.random.split(key, 3)
    raw_params = init_params(pkey, V, U, I, E, H, L)
    params = prepare_params(raw_params)

    reviews = jax.random.randint(tkey, (B, T), 0, V).astype(jnp.int32)
    review_lens = jnp.array([T, T - 3], jnp.int32)
    user_ids = jnp.array([1, 4], jnp.int32)
    item_ids = jnp.array([2, 5], jnp.int32)

    # Deterministic replacement for torch.rand(...).cuda() gumbel noise (one row per step).
    eps = 1e-20
    u_noise = jax.random.uniform(gkey, (T, B, 3), jnp.float32)
    gumbel_noise = -jnp.log(-jnp.log(u_noise + eps) + eps)

    enc_logits = network_forward(params, reviews, review_lens, user_ids, item_ids,
                                 random_flag=0, forward_flag='encode',
                                 gumbel_noise=gumbel_noise)
    dec_logits = network_forward(params, reviews, review_lens, user_ids, item_ids,
                                 random_flag=0, forward_flag='decode',
                                 gumbel_noise=gumbel_noise)
    jax.block_until_ready((enc_logits, dec_logits))

    assert enc_logits.shape == (B * T, V)
    assert dec_logits.shape == (B * T, V)
    assert bool(jnp.all(jnp.isfinite(enc_logits))) and bool(jnp.all(jnp.isfinite(dec_logits)))
    print("KERNEL_OK")
</pallas_src>

<mosaic_0001>
module attributes {stable_mosaic.version = 11 : i64} {
  func.func @_encode_fused_kernel(%arg0: memref<2xi32, #tpu.memory_space<smem>>, %arg1: memref<16x32xf32, #tpu.memory_space<vmem>>, %arg2: memref<32x192xf32, #tpu.memory_space<vmem>>, %arg3: memref<32x96xf32, #tpu.memory_space<vmem>>, %arg4: memref<32x96xf32, #tpu.memory_space<vmem>>, %arg5: memref<1x192xf32, #tpu.memory_space<vmem>>, %arg6: memref<1x32xf32, #tpu.memory_space<vmem>>, %arg7: memref<1x32xf32, #tpu.memory_space<vmem>>, %arg8: memref<64x16xf32, #tpu.memory_space<vmem>>, %arg9: memref<1x16xf32, #tpu.memory_space<vmem>>, %arg10: memref<16x32xf32, #tpu.memory_space<vmem>>, %arg11: memref<1x32xf32, #tpu.memory_space<vmem>>, %arg12: memref<32x96xf32, #tpu.memory_space<vmem>>, %arg13: memref<32x96xf32, #tpu.memory_space<vmem>>, %arg14: memref<1x96xf32, #tpu.memory_space<vmem>>, %arg15: memref<1x32xf32, #tpu.memory_space<vmem>>, %arg16: memref<32x128xf32, #tpu.memory_space<vmem>>, %arg17: memref<1x128xf32, #tpu.memory_space<vmem>>, %arg18: memref<16x128xf32, #tpu.memory_space<vmem>>, %arg19: memref<16x32xf32, #tpu.memory_space<vmem>>, %arg20: memref<16x32xf32, #tpu.memory_space<vmem>>) attributes {dimension_semantics = [], scalar_prefetch = 0 : i64, scratch_operands = 2 : i64, tpu.core_type = #tpu.core_type<tc>} {
    %c0 = arith.constant 0 : index
    %c0_0 = arith.constant 0 : index
    %0 = vector.load %arg1[%c0, %c0_0] : memref<16x32xf32, #tpu.memory_space<vmem>>, vector<16x32xf32>
    %c0_1 = arith.constant 0 : index
    %c0_2 = arith.constant 0 : index
    %1 = vector.load %arg2[%c0_1, %c0_2] : memref<32x192xf32, #tpu.memory_space<vmem>>, vector<32x192xf32>
    %cst = arith.constant dense<0.000000e+00> : vector<16x192xf32>
    %2 = tpu.matmul %0, %1, %cst {dimension_numbers = #tpu.dot_dimension_numbers<[1], [0], [0], [1], [0, 0, 1, 1], [], []>} : vector<16x32xf32>, vector<32x192xf32>, vector<16x192xf32> -> vector<16x192xf32>
    %c0_3 = arith.constant 0 : index
    %c0_4 = arith.constant 0 : index
    %3 = vector.load %arg5[%c0_3, %c0_4] : memref<1x192xf32, #tpu.memory_space<vmem>>, vector<1x192xf32>
    %4 = vector.broadcast %3 : vector<1x192xf32> to vector<16x192xf32>
    %5 = arith.addf %2, %4 : vector<16x192xf32>
    %c0_5 = arith.constant 0 : index
    %c0_6 = arith.constant 0 : index
    %6 = vector.load %arg3[%c0_5, %c0_6] : memref<32x96xf32, #tpu.memory_space<vmem>>, vector<32x96xf32>
    %c0_7 = arith.constant 0 : index
    %c0_8 = arith.constant 0 : index
    %7 = vector.load %arg4[%c0_7, %c0_8] : memref<32x96xf32, #tpu.memory_space<vmem>>, vector<32x96xf32>
    %c0_9 = arith.constant 0 : index
    %c0_10 = arith.constant 0 : index
    %8 = vector.load %arg6[%c0_9, %c0_10] : memref<1x32xf32, #tpu.memory_space<vmem>>, vector<1x32xf32>
    %c0_11 = arith.constant 0 : index
    %c0_12 = arith.constant 0 : index
    %9 = vector.load %arg7[%c0_11, %c0_12] : memref<1x32xf32, #tpu.memory_space<vmem>>, vector<1x32xf32>
    %cst_13 = arith.constant 0.000000e+00 : f32
    %10 = vector.broadcast %cst_13 : f32 to vector<8x32xf32>
    %cst_14 = arith.constant 0.000000e+00 : f32
    %11 = vector.broadcast %cst_14 : f32 to vector<8x32xf32>
    %cst_15 = arith.constant dense<0.000000e+00> : vector<8x96xf32>
    %12 = tpu.matmul %10, %6, %cst_15 {dimension_numbers = #tpu.dot_dimension_numbers<[1], [0], [0], [1], [0, 0, 1, 1], [], []>} : vector<8x32xf32>, vector<32x96xf32>, vector<8x96xf32> -> vector<8x96xf32>
    %cst_16 = arith.constant dense<0.000000e+00> : vector<8x96xf32>
    %13 = tpu.matmul %11, %7, %cst_16 {dimension_numbers = #tpu.dot_dimension_numbers<[1], [0], [0], [1], [0, 0, 1, 1], [], []>} : vector<8x32xf32>, vector<32x96xf32>, vector<8x96xf32> -> vector<8x96xf32>
    %14 = vector.extract_strided_slice %5 {offsets = [0, 0], sizes = [8, 96], strides = [1, 1]} : vector<16x192xf32> to vector<8x96xf32>
    %15 = vector.extract_strided_slice %14 {offsets = [0, 0], sizes = [8, 32], strides = [1, 1]} : vector<8x96xf32> to vector<8x32xf32>
    %16 = vector.extract_strided_slice %12 {offsets = [0, 0], sizes = [8, 32], strides = [1, 1]} : vector<8x96xf32> to vector<8x32xf32>
    %17 = arith.addf %15, %16 : vector<8x32xf32>
    %18 = arith.negf %17 : vector<8x32xf32>
    %19 = math.exp %18 : vector<8x32xf32>
    %cst_17 = arith.constant 1.000000e+00 : f32
    %20 = vector.broadcast %cst_17 : f32 to vector<8x32xf32>
    %21 = arith.addf %20, %19 : vector<8x32xf32>
    %22 = arith.divf %20, %21 : vector<8x32xf32>
    %23 = vector.extract_strided_slice %14 {offsets = [0, 32], sizes = [8, 32], strides = [1, 1]} : vector<8x96xf32> to vector<8x32xf32>
    %24 = vector.extract_strided_slice %12 {offsets = [0, 32], sizes = [8, 32], strides = [1, 1]} : vector<8x96xf32> to vector<8x32xf32>
    %25 = arith.addf %23, %24 : vector<8x32xf32>
    %26 = arith.negf %25 : vector<8x32xf32>
    %27 = math.exp %26 : vector<8x32xf32>
    %cst_18 = arith.constant 1.000000e+00 : f32
    %28 = vector.broadcast %cst_18 : f32 to vector<8x32xf32>
    %29 = arith.addf %28, %27 : vector<8x32xf32>
    %30 = arith.divf %28, %29 : vector<8x32xf32>
    %31 = vector.extract_strided_slice %14 {offsets = [0, 64], sizes = [8, 32], strides = [1, 1]} : vector<8x96xf32> to vector<8x32xf32>
    %32 = vector.extract_strided_slice %12 {offsets = [0, 64], sizes = [8, 32], strides = [1, 1]} : vector<8x96xf32> to vector<8x32xf32>
    %33 = vector.broadcast %8 : vector<1x32xf32> to vector<8x32xf32>
    %34 = arith.addf %32, %33 : vector<8x32xf32>
    %35 = arith.mulf %22, %34 : vector<8x32xf32>
    %36 = arith.addf %31, %35 : vector<8x32xf32>
    %37 = math.tanh %36 : vector<8x32xf32>
    %cst_19 = arith.constant 1.000000e+00 : f32
    %38 = vector.broadcast %cst_19 : f32 to vector<8x32xf32>
    %39 = arith.subf %38, %30 : vector<8x32xf32>
    %40 = arith.mulf %39, %37 : vector<8x32xf32>
    %41 = arith.mulf %30, %10 : vector<8x32xf32>
    %42 = arith.addf %40, %41 : vector<8x32xf32>
    %43 = vector.extract_strided_slice %5 {offsets = [8, 96], sizes = [8, 96], strides = [1, 1]} : vector<16x192xf32> to vector<8x96xf32>
    %44 = vector.extract_strided_slice %43 {offsets = [0, 0], sizes = [8, 32], strides = [1, 1]} : vector<8x96xf32> to vector<8x32xf32>
    %45 = vector.extract_strided_slice %13 {offsets = [0, 0], sizes = [8, 32], strides = [1, 1]} : vector<8x96xf32> to vector<8x32xf32>
    %46 = arith.addf %44, %45 : vector<8x32xf32>
    %47 = arith.negf %46 : vector<8x32xf32>
    %48 = math.exp %47 : vector<8x32xf32>
    %cst_20 = arith.constant 1.000000e+00 : f32
    %49 = vector.broadcast %cst_20 : f32 to vector<8x32xf32>
    %50 = arith.addf %49, %48 : vector<8x32xf32>
    %51 = arith.divf %49, %50 : vector<8x32xf32>
    %52 = vector.extract_strided_slice %43 {offsets = [0, 32], sizes = [8, 32], strides = [1, 1]} : vector<8x96xf32> to vector<8x32xf32>
    %53 = vector.extract_strided_slice %13 {offsets = [0, 32], sizes = [8, 32], strides = [1, 1]} : vector<8x96xf32> to vector<8x32xf32>
    %54 = arith.addf %52, %53 : vector<8x32xf32>
    %55 = arith.negf %54 : vector<8x32xf32>
    %56 = math.exp %55 : vector<8x32xf32>
    %cst_21 = arith.constant 1.000000e+00 : f32
    %57 = vector.broadcast %cst_21 : f32 to vector<8x32xf32>
    %58 = arith.addf %57, %56 : vector<8x32xf32>
    %59 = arith.divf %57, %58 : vector<8x32xf32>
    %60 = vector.extract_strided_slice %43 {offsets = [0, 64], sizes = [8, 32], strides = [1, 1]} : vector<8x96xf32> to vector<8x32xf32>
    %61 = vector.extract_strided_slice %13 {offsets = [0, 64], sizes = [8, 32], strides = [1, 1]} : vector<8x96xf32> to vector<8x32xf32>
    %62 = vector.broadcast %9 : vector<1x32xf32> to vector<8x32xf32>
    %63 = arith.addf %61, %62 : vector<8x32xf32>
    %64 = arith.mulf %51, %63 : vector<8x32xf32>
    %65 = arith.addf %60, %64 : vector<8x32xf32>
    %66 = math.tanh %65 : vector<8x32xf32>
    %cst_22 = arith.constant 1.000000e+00 : f32
    %67 = vector.broadcast %cst_22 : f32 to vector<8x32xf32>
    %68 = arith.subf %67, %59 : vector<8x32xf32>
    %69 = arith.mulf %68, %66 : vector<8x32xf32>
    %70 = arith.mulf %59, %11 : vector<8x32xf32>
    %71 = arith.addf %69, %70 : vector<8x32xf32>
    %c0_23 = arith.constant 0 : index
    %c0_24 = arith.constant 0 : index
    %72 = vector.load %arg19[%c0_23, %c0_24] : memref<16x32xf32, #tpu.memory_space<vmem>>, vector<8x32xf32>
    tpu.vector_store %arg19[%c0_23, %c0_24], %42 {strides = array<i32>} : memref<16x32xf32, #tpu.memory_space<vmem>>, vector<8x32xf32>,
    %c8 = arith.constant 8 : index
    %c0_25 = arith.constant 0 : index
    %73 = vector.load %arg20[%c8, %c0_25] : memref<16x32xf32, #tpu.memory_space<vmem>>, vector<8x32xf32>
    tpu.vector_store %arg20[%c8, %c0_25], %71 {strides = array<i32>} : memref<16x32xf32, #tpu.memory_space<vmem>>, vector<8x32xf32>,
    %cst_26 = arith.constant dense<0.000000e+00> : vector<8x96xf32>
    %74 = tpu.matmul %42, %6, %cst_26 {dimension_numbers = #tpu.dot_dimension_numbers<[1], [0], [0], [1], [0, 0, 1, 1], [], []>} : vector<8x32xf32>, vector<32x96xf32>, vector<8x96xf32> -> vector<8x96xf32>
    %cst_27 = arith.constant dense<0.000000e+00> : vector<8x96xf32>
    %75 = tpu.matmul %71, %7, %cst_27 {dimension_numbers = #tpu.dot_dimension_numbers<[1], [0], [0], [1], [0, 0, 1, 1], [], []>} : vector<8x32xf32>, vector<32x96xf32>, vector<8x96xf32> -> vector<8x96xf32>
    %76 = vector.extract_strided_slice %5 {offsets = [8, 0], sizes = [8, 96], strides = [1, 1]} : vector<16x192xf32> to vector<8x96xf32>
    %77 = vector.extract_strided_slice %76 {offsets = [0, 0], sizes = [8, 32], strides = [1, 1]} : vector<8x96xf32> to vector<8x32xf32>
    %78 = vector.extract_strided_slice %74 {offsets = [0, 0], sizes = [8, 32], strides = [1, 1]} : vector<8x96xf32> to vector<8x32xf32>
    %79 = arith.addf %77, %78 : vector<8x32xf32>
    %80 = arith.negf %79 : vector<8x32xf32>
    %81 = math.exp %80 : vector<8x32xf32>
    %cst_28 = arith.constant 1.000000e+00 : f32
    %82 = vector.broadcast %cst_28 : f32 to vector<8x32xf32>
    %83 = arith.addf %82, %81 : vector<8x32xf32>
    %84 = arith.divf %82, %83 : vector<8x32xf32>
    %85 = vector.extract_strided_slice %76 {offsets = [0, 32], sizes = [8, 32], strides = [1, 1]} : vector<8x96xf32> to vector<8x32xf32>
    %86 = vector.extract_strided_slice %74 {offsets = [0, 32], sizes = [8, 32], strides = [1, 1]} : vector<8x96xf32> to vector<8x32xf32>
    %87 = arith.addf %85, %86 : vector<8x32xf32>
    %88 = arith.negf %87 : vector<8x32xf32>
    %89 = math.exp %88 : vector<8x32xf32>
    %cst_29 = arith.constant 1.000000e+00 : f32
    %90 = vector.broadcast %cst_29 : f32 to vector<8x32xf32>
    %91 = arith.addf %90, %89 : vector<8x32xf32>
    %92 = arith.divf %90, %91 : vector<8x32xf32>
    %93 = vector.extract_strided_slice %76 {offsets = [0, 64], sizes = [8, 32], strides = [1, 1]} : vector<8x96xf32> to vector<8x32xf32>
    %94 = vector.extract_strided_slice %74 {offsets = [0, 64], sizes = [8, 32], strides = [1, 1]} : vector<8x96xf32> to vector<8x32xf32>
    %95 = vector.broadcast %8 : vector<1x32xf32> to vector<8x32xf32>
    %96 = arith.addf %94, %95 : vector<8x32xf32>
    %97 = arith.mulf %84, %96 : vector<8x32xf32>
    %98 = arith.addf %93, %97 : vector<8x32xf32>
    %99 = math.tanh %98 : vector<8x32xf32>
    %cst_30 = arith.constant 1.000000e+00 : f32
    %100 = vector.broadcast %cst_30 : f32 to vector<8x32xf32>
    %101 = arith.subf %100, %92 : vector<8x32xf32>
    %102 = arith.mulf %101, %99 : vector<8x32xf32>
    %103 = arith.mulf %92, %42 : vector<8x32xf32>
    %104 = arith.addf %102, %103 : vector<8x32xf32>
    %105 = vector.extract_strided_slice %5 {offsets = [0, 96], sizes = [8, 96], strides = [1, 1]} : vector<16x192xf32> to vector<8x96xf32>
    %106 = vector.extract_strided_slice %105 {offsets = [0, 0], sizes = [8, 32], strides = [1, 1]} : vector<8x96xf32> to vector<8x32xf32>
    %107 = vector.extract_strided_slice %75 {offsets = [0, 0], sizes = [8, 32], strides = [1, 1]} : vector<8x96xf32> to vector<8x32xf32>
    %108 = arith.addf %106, %107 : vector<8x32xf32>
    %109 = arith.negf %108 : vector<8x32xf32>
    %110 = math.exp %109 : vector<8x32xf32>
    %cst_31 = arith.constant 1.000000e+00 : f32
    %111 = vector.broadcast %cst_31 : f32 to vector<8x32xf32>
    %112 = arith.addf %111, %110 : vector<8x32xf32>
    %113 = arith.divf %111, %112 : vector<8x32xf32>
    %114 = vector.extract_strided_slice %105 {offsets = [0, 32], sizes = [8, 32], strides = [1, 1]} : vector<8x96xf32> to vector<8x32xf32>
    %115 = vector.extract_strided_slice %75 {offsets = [0, 32], sizes = [8, 32], strides = [1, 1]} : vector<8x96xf32> to vector<8x32xf32>
    %116 = arith.addf %114, %115 : vector<8x32xf32>
    %117 = arith.negf %116 : vector<8x32xf32>
    %118 = math.exp %117 : vector<8x32xf32>
    %cst_32 = arith.constant 1.000000e+00 : f32
    %119 = vector.broadcast %cst_32 : f32 to vector<8x32xf32>
    %120 = arith.addf %119, %118 : vector<8x32xf32>
    %121 = arith.divf %119, %120 : vector<8x32xf32>
    %122 = vector.extract_strided_slice %105 {offsets = [0, 64], sizes = [8, 32], strides = [1, 1]} : vector<8x96xf32> to vector<8x32xf32>
    %123 = vector.extract_strided_slice %75 {offsets = [0, 64], sizes = [8, 32], strides = [1, 1]} : vector<8x96xf32> to vector<8x32xf32>
    %124 = vector.broadcast %9 : vector<1x32xf32> to vector<8x32xf32>
    %125 = arith.addf %123, %124 : vector<8x32xf32>
    %126 = arith.mulf %113, %125 : vector<8x32xf32>
    %127 = arith.addf %122, %126 : vector<8x32xf32>
    %128 = math.tanh %127 : vector<8x32xf32>
    %cst_33 = arith.constant 1.000000e+00 : f32
    %129 = vector.broadcast %cst_33 : f32 to vector<8x32xf32>
    %130 = arith.subf %129, %121 : vector<8x32xf32>
    %131 = arith.mulf %130, %128 : vector<8x32xf32>
    %132 = arith.mulf %121, %71 : vector<8x32xf32>
    %133 = arith.addf %131, %132 : vector<8x32xf32>
    %c8_34 = arith.constant 8 : index
    %c0_35 = arith.constant 0 : index
    %134 = vector.load %arg19[%c8_34, %c0_35] : memref<16x32xf32, #tpu.memory_space<vmem>>, vector<8x32xf32>
    tpu.vector_store %arg19[%c8_34, %c0_35], %104 {strides = array<i32>} : memref<16x32xf32, #tpu.memory_space<vmem>>, vector<8x32xf32>,
    %c0_36 = arith.constant 0 : index
    %c0_37 = arith.constant 0 : index
    %135 = vector.load %arg20[%c0_36, %c0_37] : memref<16x32xf32, #tpu.memory_space<vmem>>, vector<8x32xf32>
    tpu.vector_store %arg20[%c0_36, %c0_37], %133 {strides = array<i32>} : memref<16x32xf32, #tpu.memory_space<vmem>>, vector<8x32xf32>,
    %c0_38 = arith.constant 0 : index
    %136 = memref.load %arg0[%c0_38] : memref<2xi32, #tpu.memory_space<smem>>
    %c0_i32 = arith.constant 0 : i32
    %137 = arith.addi %c0_i32, %136 : i32
    %c1_i32 = arith.constant 1 : i32
    %138 = arith.subi %137, %c1_i32 : i32
    %139 = arith.index_cast %138 : i32 to index
    %c0_39 = arith.constant 0 : index
    %140 = vector.load %arg19[%139, %c0_39] : memref<16x32xf32, #tpu.memory_space<vmem>>, vector<1x32xf32>
    %141 = arith.index_cast %138 : i32 to index
    %c0_40 = arith.constant 0 : index
    %142 = vector.load %arg20[%141, %c0_40] : memref<16x32xf32, #tpu.memory_space<vmem>>, vector<1x32xf32>
    %c1 = arith.constant 1 : index
    %143 = memref.load %arg0[%c1] : memref<2xi32, #tpu.memory_space<smem>>
    %c8_i32 = arith.constant 8 : i32
    %144 = arith.addi %c8_i32, %143 : i32
    %c1_i32_41 = arith.constant 1 : i32
    %145 = arith.subi %144, %c1_i32_41 : i32
    %146 = arith.index_cast %145 : i32 to index
    %c0_42 = arith.constant 0 : index
    %147 = vector.load %arg19[%146, %c0_42] : memref<16x32xf32, #tpu.memory_space<vmem>>, vector<1x32xf32>
    %148 = arith.index_cast %145 : i32 to index
    %c0_43 = arith.constant 0 : index
    %149 = vector.load %arg20[%148, %c0_43] : memref<16x32xf32, #tpu.memory_space<vmem>>, vector<1x32xf32>
    %150 = tpu.concatenate %140, %147 in 0 : vector<1x32xf32>, vector<1x32xf32> -> vector<2x32xf32>
    %151 = tpu.concatenate %142, %149 in 0 : vector<1x32xf32>, vector<1x32xf32> -> vector<2x32xf32>
    %c0_44 = arith.constant 0 : index
    %c0_45 = arith.constant 0 : index
    %152 = vector.load %arg8[%c0_44, %c0_45] : memref<64x16xf32, #tpu.memory_space<vmem>>, vector<64x16xf32>
    %153 = vector.extract_strided_slice %152 {offsets = [0, 0], sizes = [32, 16], strides = [1, 1]} : vector<64x16xf32> to vector<32x16xf32>
    %cst_46 = arith.constant dense<0.000000e+00> : vector<2x16xf32>
    %154 = tpu.matmul %150, %153, %cst_46 {dimension_numbers = #tpu.dot_dimension_numbers<[1], [0], [0], [1], [0, 0, 1, 1], [], []>} : vector<2x32xf32>, vector<32x16xf32>, vector<2x16xf32> -> vector<2x16xf32>
    %155 = vector.extract_strided_slice %152 {offsets = [32, 0], sizes = [32, 16], strides = [1, 1]} : vector<64x16xf32> to vector<32x16xf32>
    %cst_47 = arith.constant dense<0.000000e+00> : vector<2x16xf32>
    %156 = tpu.matmul %151, %155, %cst_47 {dimension_numbers = #tpu.dot_dimension_numbers<[1], [0], [0], [1], [0, 0, 1, 1], [], []>} : vector<2x32xf32>, vector<32x16xf32>, vector<2x16xf32> -> vector<2x16xf32>
    %157 = arith.addf %154, %156 : vector<2x16xf32>
    %c0_48 = arith.constant 0 : index
    %c0_49 = arith.constant 0 : index
    %158 = vector.load %arg9[%c0_48, %c0_49] : memref<1x16xf32, #tpu.memory_space<vmem>>, vector<1x16xf32>
    %159 = vector.broadcast %158 : vector<1x16xf32> to vector<2x16xf32>
    %160 = arith.addf %157, %159 : vector<2x16xf32>
    %161 = math.tanh %160 : vector<2x16xf32>
    %c0_50 = arith.constant 0 : index
    %c0_51 = arith.constant 0 : index
    %162 = vector.load %arg10[%c0_50, %c0_51] : memref<16x32xf32, #tpu.memory_space<vmem>>, vector<16x32xf32>
    %cst_52 = arith.constant dense<0.000000e+00> : vector<2x32xf32>
    %163 = tpu.matmul %161, %162, %cst_52 {dimension_numbers = #tpu.dot_dimension_numbers<[1], [0], [0], [1], [0, 0, 1, 1], [], []>} : vector<2x16xf32>, vector<16x32xf32>, vector<2x32xf32> -> vector<2x32xf32>
    %c0_53 = arith.constant 0 : index
    %c0_54 = arith.constant 0 : index
    %164 = vector.load %arg11[%c0_53, %c0_54] : memref<1x32xf32, #tpu.memory_space<vmem>>, vector<1x32xf32>
    %165 = vector.broadcast %164 : vector<1x32xf32> to vector<2x32xf32>
    %166 = arith.addf %163, %165 : vector<2x32xf32>
    %c0_55 = arith.constant 0 : index
    %c0_56 = arith.constant 0 : index
    %167 = vector.load %arg12[%c0_55, %c0_56] : memref<32x96xf32, #tpu.memory_space<vmem>>, vector<32x96xf32>
    %cst_57 = arith.constant dense<0.000000e+00> : vector<16x96xf32>
    %168 = tpu.matmul %0, %167, %cst_57 {dimension_numbers = #tpu.dot_dimension_numbers<[1], [0], [0], [1], [0, 0, 1, 1], [], []>} : vector<16x32xf32>, vector<32x96xf32>, vector<16x96xf32> -> vector<16x96xf32>
    %c0_58 = arith.constant 0 : index
    %c0_59 = arith.constant 0 : index
    %169 = vector.load %arg14[%c0_58, %c0_59] : memref<1x96xf32, #tpu.memory_space<vmem>>, vector<1x96xf32>
    %170 = vector.broadcast %169 : vector<1x96xf32> to vector<16x96xf32>
    %171 = arith.addf %168, %170 : vector<16x96xf32>
    %c0_60 = arith.constant 0 : index
    %c0_61 = arith.constant 0 : index
    %172 = vector.load %arg12[%c0_60, %c0_61] : memref<32x96xf32, #tpu.memory_space<vmem>>, vector<32x96xf32>
    %cst_62 = arith.constant dense<0.000000e+00> : vector<2x96xf32>
    %173 = tpu.matmul %166, %172, %cst_62 {dimension_numbers = #tpu.dot_dimension_numbers<[1], [0], [0], [1], [0, 0, 1, 1], [], []>} : vector<2x32xf32>, vector<32x96xf32>, vector<2x96xf32> -> vector<2x96xf32>
    %c0_63 = arith.constant 0 : index
    %c0_64 = arith.constant 0 : index
    %174 = vector.load %arg13[%c0_63, %c0_64] : memref<32x96xf32, #tpu.memory_space<vmem>>, vector<32x96xf32>
    %c0_65 = arith.constant 0 : index
    %c0_66 = arith.constant 0 : index
    %175 = vector.load %arg15[%c0_65, %c0_66] : memref<1x32xf32, #tpu.memory_space<vmem>>, vector<1x32xf32>
    %cst_67 = arith.constant 0.000000e+00 : f32
    %176 = vector.broadcast %cst_67 : f32 to vector<8x32xf32>
    %177 = vector.extract_strided_slice %171 {offsets = [0, 0], sizes = [8, 96], strides = [1, 1]} : vector<16x96xf32> to vector<8x96xf32>
    %178 = vector.extract_strided_slice %173 {offsets = [0, 0], sizes = [1, 96], strides = [1, 1]} : vector<2x96xf32> to vector<1x96xf32>
    %179 = vector.broadcast %178 : vector<1x96xf32> to vector<8x96xf32>
    %180 = arith.addf %177, %179 : vector<8x96xf32>
    %cst_68 = arith.constant dense<0.000000e+00> : vector<8x96xf32>
    %181 = tpu.matmul %176, %174, %cst_68 {dimension_numbers = #tpu.dot_dimension_numbers<[1], [0], [0], [1], [0, 0, 1, 1], [], []>} : vector<8x32xf32>, vector<32x96xf32>, vector<8x96xf32> -> vector<8x96xf32>
    %182 = vector.extract_strided_slice %180 {offsets = [0, 0], sizes = [8, 32], strides = [1, 1]} : vector<8x96xf32> to vector<8x32xf32>
    %183 = vector.extract_strided_slice %181 {offsets = [0, 0], sizes = [8, 32], strides = [1, 1]} : vector<8x96xf32> to vector<8x32xf32>
    %184 = arith.addf %182, %183 : vector<8x32xf32>
    %185 = arith.negf %184 : vector<8x32xf32>
    %186 = math.exp %185 : vector<8x32xf32>
    %cst_69 = arith.constant 1.000000e+00 : f32
    %187 = vector.broadcast %cst_69 : f32 to vector<8x32xf32>
    %188 = arith.addf %187, %186 : vector<8x32xf32>
    %189 = arith.divf %187, %188 : vector<8x32xf32>
    %190 = vector.extract_strided_slice %180 {offsets = [0, 32], sizes = [8, 32], strides = [1, 1]} : vector<8x96xf32> to vector<8x32xf32>
    %191 = vector.extract_strided_slice %181 {offsets = [0, 32], sizes = [8, 32], strides = [1, 1]} : vector<8x96xf32> to vector<8x32xf32>
    %192 = arith.addf %190, %191 : vector<8x32xf32>
    %193 = arith.negf %192 : vector<8x32xf32>
    %194 = math.exp %193 : vector<8x32xf32>
    %cst_70 = arith.constant 1.000000e+00 : f32
    %195 = vector.broadcast %cst_70 : f32 to vector<8x32xf32>
    %196 = arith.addf %195, %194 : vector<8x32xf32>
    %197 = arith.divf %195, %196 : vector<8x32xf32>
    %198 = vector.extract_strided_slice %180 {offsets = [0, 64], sizes = [8, 32], strides = [1, 1]} : vector<8x96xf32> to vector<8x32xf32>
    %199 = vector.extract_strided_slice %181 {offsets = [0, 64], sizes = [8, 32], strides = [1, 1]} : vector<8x96xf32> to vector<8x32xf32>
    %200 = vector.broadcast %175 : vector<1x32xf32> to vector<8x32xf32>
    %201 = arith.addf %199, %200 : vector<8x32xf32>
    %202 = arith.mulf %189, %201 : vector<8x32xf32>
    %203 = arith.addf %198, %202 : vector<8x32xf32>
    %204 = math.tanh %203 : vector<8x32xf32>
    %cst_71 = arith.constant 1.000000e+00 : f32
    %205 = vector.broadcast %cst_71 : f32 to vector<8x32xf32>
    %206 = arith.subf %205, %197 : vector<8x32xf32>
    %207 = arith.mulf %206, %204 : vector<8x32xf32>
    %208 = arith.mulf %197, %176 : vector<8x32xf32>
    %209 = arith.addf %207, %208 : vector<8x32xf32>
    %210 = vector.extract_strided_slice %171 {offsets = [8, 0], sizes = [8, 96], strides = [1, 1]} : vector<16x96xf32> to vector<8x96xf32>
    %211 = vector.extract_strided_slice %173 {offsets = [1, 0], sizes = [1, 96], strides = [1, 1]} : vector<2x96xf32> to vector<1x96xf32>
    %212 = vector.broadcast %211 : vector<1x96xf32> to vector<8x96xf32>
    %213 = arith.addf %210, %212 : vector<8x96xf32>
    %cst_72 = arith.constant dense<0.000000e+00> : vector<8x96xf32>
    %214 = tpu.matmul %209, %174, %cst_72 {dimension_numbers = #tpu.dot_dimension_numbers<[1], [0], [0], [1], [0, 0, 1, 1], [], []>} : vector<8x32xf32>, vector<32x96xf32>, vector<8x96xf32> -> vector<8x96xf32>
    %215 = vector.extract_strided_slice %213 {offsets = [0, 0], sizes = [8, 32], strides = [1, 1]} : vector<8x96xf32> to vector<8x32xf32>
    %216 = vector.extract_strided_slice %214 {offsets = [0, 0], sizes = [8, 32], strides = [1, 1]} : vector<8x96xf32> to vector<8x32xf32>
    %217 = arith.addf %215, %216 : vector<8x32xf32>
    %218 = arith.negf %217 : vector<8x32xf32>
    %219 = math.exp %218 : vector<8x32xf32>
    %cst_73 = arith.constant 1.000000e+00 : f32
    %220 = vector.broadcast %cst_73 : f32 to vector<8x32xf32>
    %221 = arith.addf %220, %219 : vector<8x32xf32>
    %222 = arith.divf %220, %221 : vector<8x32xf32>
    %223 = vector.extract_strided_slice %213 {offsets = [0, 32], sizes = [8, 32], strides = [1, 1]} : vector<8x96xf32> to vector<8x32xf32>
    %224 = vector.extract_strided_slice %214 {offsets = [0, 32], sizes = [8, 32], strides = [1, 1]} : vector<8x96xf32> to vector<8x32xf32>
    %225 = arith.addf %223, %224 : vector<8x32xf32>
    %226 = arith.negf %225 : vector<8x32xf32>
    %227 = math.exp %226 : vector<8x32xf32>
    %cst_74 = arith.constant 1.000000e+00 : f32
    %228 = vector.broadcast %cst_74 : f32 to vector<8x32xf32>
    %229 = arith.addf %228, %227 : vector<8x32xf32>
    %230 = arith.divf %228, %229 : vector<8x32xf32>
    %231 = vector.extract_strided_slice %213 {offsets = [0, 64], sizes = [8, 32], strides = [1, 1]} : vector<8x96xf32> to vector<8x32xf32>
    %232 = vector.extract_strided_slice %214 {offsets = [0, 64], sizes = [8, 32], strides = [1, 1]} : vector<8x96xf32> to vector<8x32xf32>
    %233 = vector.broadcast %175 : vector<1x32xf32> to vector<8x32xf32>
    %234 = arith.addf %232, %233 : vector<8x32xf32>
    %235 = arith.mulf %222, %234 : vector<8x32xf32>
    %236 = arith.addf %231, %235 : vector<8x32xf32>
    %237 = math.tanh %236 : vector<8x32xf32>
    %cst_75 = arith.constant 1.000000e+00 : f32
    %238 = vector.broadcast %cst_75 : f32 to vector<8x32xf32>
    %239 = arith.subf %238, %230 : vector<8x32xf32>
    %240 = arith.mulf %239, %237 : vector<8x32xf32>
    %241 = arith.mulf %230, %209 : vector<8x32xf32>
    %242 = arith.addf %240, %241 : vector<8x32xf32>
    %243 = tpu.concatenate %209, %242 in 0 : vector<8x32xf32>, vector<8x32xf32> -> vector<16x32xf32>
    %c0_76 = arith.constant 0 : index
    %c0_77 = arith.constant 0 : index
    %244 = vector.load %arg16[%c0_76, %c0_77] : memref<32x128xf32, #tpu.memory_space<vmem>>, vector<32x128xf32>
    %cst_78 = arith.constant dense<0.000000e+00> : vector<16x128xf32>
    %245 = tpu.matmul %243, %244, %cst_78 {dimension_numbers = #tpu.dot_dimension_numbers<[1], [0], [0], [1], [0, 0, 1, 1], [], []>} : vector<16x32xf32>, vector<32x128xf32>, vector<16x128xf32> -> vector<16x128xf32>
    %c0_79 = arith.constant 0 : index
    %c0_80 = arith.constant 0 : index
    %246 = vector.load %arg17[%c0_79, %c0_80] : memref<1x128xf32, #tpu.memory_space<vmem>>, vector<1x128xf32>
    %247 = vector.broadcast %246 : vector<1x128xf32> to vector<16x128xf32>
    %248 = arith.addf %245, %247 : vector<16x128xf32>
    %c0_81 = arith.constant 0 : index
    %c0_82 = arith.constant 0 : index
    %249 = vector.load %arg18[%c0_81, %c0_82] : memref<16x128xf32, #tpu.memory_space<vmem>>, vector<16x128xf32>
    tpu.vector_store %arg18[%c0_81, %c0_82], %248 {strides = array<i32>} : memref<16x128xf32, #tpu.memory_space<vmem>>, vector<16x128xf32>,
    return
  }
}

</mosaic_0001>

<llo_original>
// kernel: encode_forward.1
$region0: #{encode_forward.1}
  #allocation0 [shape = 'u32[]', space=smem, size = 0x4, offset = 0x4, fixed_abs, tag = 'smem constant byte address 0x4 - core index']
  #allocation1 [shape = 'u32[144,128]{1,0:T(1,128)}', space=vmem, size = 0x12000, scoped, tag = 'internal scratch']
  #allocation2 [shape = 'f32[16,32]{1,0:T(8,128)}', space=vmem, size = 0x2000, scoped, tag = 'scratch operand']
  #allocation3 [shape = 'f32[16,32]{1,0:T(8,128)}', space=vmem, size = 0x2000, scoped, tag = 'scratch operand']
  %s0 = inlined_call_operand.vmem [shape: s32[2], index: 0, kind: input, shape index: {}]
  %s1 = inlined_call_operand.vmem [shape: f32[16,32], index: 1, kind: input, shape index: {}]
  %s2 = inlined_call_operand.vmem [shape: f32[32,192], index: 2, kind: input, shape index: {}]
  %s3 = inlined_call_operand.vmem [shape: f32[32,96], index: 3, kind: input, shape index: {}]
  %s4 = inlined_call_operand.vmem [shape: f32[32,96], index: 4, kind: input, shape index: {}]
  %s5 = inlined_call_operand.vmem [shape: f32[1,192], index: 5, kind: input, shape index: {}]
  %s6 = inlined_call_operand.vmem [shape: f32[1,32], index: 6, kind: input, shape index: {}]
  %s7 = inlined_call_operand.vmem [shape: f32[1,32], index: 7, kind: input, shape index: {}]
  %s8 = inlined_call_operand.vmem [shape: f32[64,16], index: 8, kind: input, shape index: {}]
  %s9 = inlined_call_operand.vmem [shape: f32[1,16], index: 9, kind: input, shape index: {}]
  %s10 = inlined_call_operand.vmem [shape: f32[16,32], index: 10, kind: input, shape index: {}]
  %s11 = inlined_call_operand.vmem [shape: f32[1,32], index: 11, kind: input, shape index: {}]
  %s12 = inlined_call_operand.vmem [shape: f32[32,96], index: 12, kind: input, shape index: {}]
  %s13 = inlined_call_operand.vmem [shape: f32[32,96], index: 13, kind: input, shape index: {}]
  %s14 = inlined_call_operand.vmem [shape: f32[1,96], index: 14, kind: input, shape index: {}]
  %s15 = inlined_call_operand.vmem [shape: f32[1,32], index: 15, kind: input, shape index: {}]
  %s16 = inlined_call_operand.vmem [shape: f32[32,128], index: 16, kind: input, shape index: {}]
  %s17 = inlined_call_operand.vmem [shape: f32[1,128], index: 17, kind: input, shape index: {}]
  %s18 = inlined_call_operand.hbm [shape: f32[16,128], index: 18, kind: output, shape index: {}]
  %s19 = sld [smem:[#allocation0]]
  $region86: #{encode_forward.1} parent=0
    _
  %s21 = ssub.s32 1, %s19
  %s22 = scalar_select 0, %s21, %s19
  $region1: #{encode_forward.1} parent=0
    #allocation4 [shape = 'u8[512]{0}', space=smem, size = 0x200, scoped, tag = 'input window, operand 0, single buffered']
    #allocation5 [shape = 's32[1]{0}', space=sflag, size = 0x4, scoped, tag = 'scoped memory for encode_forward.1']
    #allocation6 [shape = 's32[1]{0}', space=sflag, size = 0x4, scoped, tag = 'scoped memory for encode_forward.1']
    #allocation7 [shape = 'u8[8192]{0}', space=vmem, size = 0x2000, scoped, tag = 'output window, operand 0, single buffered']
    %23 = vsyncpa [#allocation6], 0
    %24 = vsyncpa [#allocation5], 0
    // Predicated region
    $region2: #{encode_forward.1} parent=1 // pred_check
      _
    $region3: #{encode_forward.1} parent=1 // pred_check_branch
      %26 = sbr.rel (0) target = $region5
    $region4: #{encode_forward.1} parent=1 // pred_region
      %s28 = ssub.s32 16, 16
      %29 = vsyncadd [#allocation6], %s28
      %s31 = sshll.u32 %s0, 4
      %s32 = int_to_ptr.vmem [resolvable:$true] %s31
      %34 = dma.vmem_to_smem %s32, 16, [#allocation4], [#allocation6]
    $region5: #{encode_forward.1} parent=1 // pred_fallthru
      _
    // Predicated region
    $region6: #{encode_forward.1} parent=1 // pred_check
      _
    $region7: #{encode_forward.1} parent=1 // pred_check_branch
      %36 = sbr.rel (0) target = $region9
    $region8: #{encode_forward.1} parent=1 // pred_region
      _
    $region9: #{encode_forward.1} parent=1 // pred_fallthru
      _
    // Predicated region
    $region10: #{encode_forward.1} parent=1 // pred_check
      _
    $region11: #{encode_forward.1} parent=1 // pred_check_branch
      %38 = sbr.rel (0) target = $region13
    $region12: #{encode_forward.1} parent=1 // pred_region
      _
    $region13: #{encode_forward.1} parent=1 // pred_fallthru
      _
    // Predicated region
    $region14: #{encode_forward.1} parent=1 // pred_check
      _
    $region15: #{encode_forward.1} parent=1 // pred_check_branch
      %40 = sbr.rel (0) target = $region17
    $region16: #{encode_forward.1} parent=1 // pred_region
      _
    $region17: #{encode_forward.1} parent=1 // pred_fallthru
      _
    // Predicated region
    $region18: #{encode_forward.1} parent=1 // pred_check
      _
    $region19: #{encode_forward.1} parent=1 // pred_check_branch
      %42 = sbr.rel (0) target = $region21
    $region20: #{encode_forward.1} parent=1 // pred_region
      _
    $region21: #{encode_forward.1} parent=1 // pred_fallthru
      _
    // Predicated region
    $region22: #{encode_forward.1} parent=1 // pred_check
      _
    $region23: #{encode_forward.1} parent=1 // pred_check_branch
      %44 = sbr.rel (0) target = $region25
    $region24: #{encode_forward.1} parent=1 // pred_region
      _
    $region25: #{encode_forward.1} parent=1 // pred_fallthru
      _
    // Predicated region
    $region26: #{encode_forward.1} parent=1 // pred_check
      _
    $region27: #{encode_forward.1} parent=1 // pred_check_branch
      %46 = sbr.rel (0) target = $region29
    $region28: #{encode_forward.1} parent=1 // pred_region
      _
    $region29: #{encode_forward.1} parent=1 // pred_fallthru
      _
    // Predicated region
    $region30: #{encode_forward.1} parent=1 // pred_check
      _
    $region31: #{encode_forward.1} parent=1 // pred_check_branch
      %48 = sbr.rel (0) target = $region33
    $region32: #{encode_forward.1} parent=1 // pred_region
      _
    $region33: #{encode_forward.1} parent=1 // pred_fallthru
      _
    // Predicated region
    $region34: #{encode_forward.1} parent=1 // pred_check
      _
    $region35: #{encode_forward.1} parent=1 // pred_check_branch
      %50 = sbr.rel (0) target = $region37
    $region36: #{encode_forward.1} parent=1 // pred_region
      _
    $region37: #{encode_forward.1} parent=1 // pred_fallthru
      _
    // Predicated region
    $region38: #{encode_forward.1} parent=1 // pred_check
      _
    $region39: #{encode_forward.1} parent=1 // pred_check_branch
      %52 = sbr.rel (0) target = $region41
    $region40: #{encode_forward.1} parent=1 // pred_region
      _
    $region41: #{encode_forward.1} parent=1 // pred_fallthru
      _
    // Predicated region
    $region42: #{encode_forward.1} parent=1 // pred_check
      _
    $region43: #{encode_forward.1} parent=1 // pred_check_branch
      %54 = sbr.rel (0) target = $region45
    $region44: #{encode_forward.1} parent=1 // pred_region
      _
    $region45: #{encode_forward.1} parent=1 // pred_fallthru
      _
    // Predicated region
    $region46: #{encode_forward.1} parent=1 // pred_check
      _
    $region47: #{encode_forward.1} parent=1 // pred_check_branch
      %56 = sbr.rel (0) target = $region49
    $region48: #{encode_forward.1} parent=1 // pred_region
      _
    $region49: #{encode_forward.1} parent=1 // pred_fallthru
      _
    // Predicated region
    $region50: #{encode_forward.1} parent=1 // pred_check
      _
    $region51: #{encode_forward.1} parent=1 // pred_check_branch
      %58 = sbr.rel (0) target = $region53
    $region52: #{encode_forward.1} parent=1 // pred_region
      _
    $region53: #{encode_forward.1} parent=1 // pred_fallthru
      _
    // Predicated region
    $region54: #{encode_forward.1} parent=1 // pred_check
      _
    $region55: #{encode_forward.1} parent=1 // pred_check_branch
      %60 = sbr.rel (0) target = $region57
    $region56: #{encode_forward.1} parent=1 // pred_region
      _
    $region57: #{encode_forward.1} parent=1 // pred_fallthru
      _
    // Predicated region
    $region58: #{encode_forward.1} parent=1 // pred_check
      _
    $region59: #{encode_forward.1} parent=1 // pred_check_branch
      %62 = sbr.rel (0) target = $region61
    $region60: #{encode_forward.1} parent=1 // pred_region
      _
    $region61: #{encode_forward.1} parent=1 // pred_fallthru
      _
    // Predicated region
    $region62: #{encode_forward.1} parent=1 // pred_check
      _
    $region63: #{encode_forward.1} parent=1 // pred_check_branch
      %64 = sbr.rel (0) target = $region65
    $region64: #{encode_forward.1} parent=1 // pred_region
      _
    $region65: #{encode_forward.1} parent=1 // pred_fallthru
      _
    // Predicated region
    $region66: #{encode_forward.1} parent=1 // pred_check
      _
    $region67: #{encode_forward.1} parent=1 // pred_check_branch
      %66 = sbr.rel (0) target = $region69
    $region68: #{encode_forward.1} parent=1 // pred_region
      _
    $region69: #{encode_forward.1} parent=1 // pred_fallthru
      _
    // Predicated region
    $region70: #{encode_forward.1} parent=1 // pred_check
      _
    $region71: #{encode_forward.1} parent=1 // pred_check_branch
      %68 = sbr.rel (0) target = $region73
    $region72: #{encode_forward.1} parent=1 // pred_region
      _
    $region73: #{encode_forward.1} parent=1 // pred_fallthru
      _
    // Predicated region
    $region74: #{encode_forward.1} parent=1 // pred_check
      _
    $region75: #{encode_forward.1} parent=1 // pred_check_branch
      %70 = sbr.rel (0) target = $region77
    $region76: #{encode_forward.1} parent=1 // pred_region
      %71 = dma.done [#allocation6], 16
    $region77: #{encode_forward.1} parent=1 // pred_fallthru
      _
    %72 = sfence
    %v73 = vld [vmem:[%s1] sm:$0xff]
    %v74 = vld [vmem:[%s1 + $0x8] sm:$0xff]
    %v75 = vld [vmem:[%s2] sm:$0xff]
    %v76 = vld [vmem:[%s2 + $0x8] sm:$0xff]
    %v77 = vld [vmem:[%s2 + $0x10] sm:$0xff]
    %v78 = vld [vmem:[%s2 + $0x18] sm:$0xff]
    %v79 = vld [vmem:[%s2 + $0x20] sm:$0xff]
    %v80 = vld [vmem:[%s2 + $0x28] sm:$0xff]
    %v81 = vld [vmem:[%s2 + $0x30] sm:$0xff]
    %v82 = vld [vmem:[%s2 + $0x38] sm:$0xff]
    %v83 = vld [vmem:[%s5] sm:$0x3]
    %v85 = vlaneseq
    %v86 = vshrl.u32 %v85, 7
    %v87 = vsub.s32 0, %v86
    %v88 = vrot.slane %v83, %v87
    %v89 = vlaneseq
    %v90 = vshrl.u32 %v89, 7
    %v91 = vsub.s32 1, %v90
    %v92 = vrot.slane %v83, %v91
    %vm95 = vcmask 261120
    %v97 = vsel %vm95, %v73, 0
    %v100 = vsel %vm95, %v74, 0
    %102 = vmatprep.subr.mxu0 0.0
    %103 = vmatpush1.msra.mxu0 0.0
    %104 = vmatprep.subr.mxu0 0.0
    %105 = vmatpush1.msra.mxu0 0.0
    %106 = vmatprep.subr.mxu0 0.0
    %107 = vmatpush1.msra.mxu0 0.0
    %108 = vmatprep.subr.mxu0 0.0
    %109 = vmatpush1.msra.mxu0 0.0
    %110 = vmatprep.subr.mxu0 0.0
    %111 = vmatpush1.msra.mxu0 0.0
    %112 = vmatprep.subr.mxu0 0.0
    %113 = vmatpush1.msra.mxu0 0.0
    %114 = vmatprep.subr.mxu0 0.0
    %115 = vmatpush1.msra.mxu0 0.0
    %116 = vmatprep.subr.mxu0 0.0
    %117 = vmatpush1.msra.mxu0 0.0
    %118 = vmatprep.subr.mxu0 0.0
    %119 = vmatpush1.msra.mxu0 0.0
    %120 = vmatprep.subr.mxu0 0.0
    %121 = vmatpush1.msra.mxu0 0.0
    %122 = vmatprep.subr.mxu0 0.0
    %123 = vmatpush1.msra.mxu0 0.0
    %124 = vmatprep.subr.mxu0 0.0
    %125 = vmatpush1.msra.mxu0 0.0
    %126 = vmatprep.subr.mxu0 %v82
    %127 = vmatpush1.msra.mxu0 %v81
    %128 = vmatprep.subr.mxu0 %v80
    %129 = vmatpush1.msra.mxu0 %v79
    %130 = vmatprep.subr.mxu0 %v78
    %131 = vmatpush1.msra.mxu0 %v77
    %132 = vmatprep.subr.mxu0 %v76
    %133 = vmatpush1.msra.mxu0 %v75
    %134 = vmatprep.subr.mxu0 0.0
    %135 = vmatpush2.msra.mxu0 0.0
    %136 = vmatprep.subr.mxu0 0.0
    %137 = vmatpush2.msra.mxu0 0.0
    %138 = vmatprep.subr.mxu0 0.0
    %139 = vmatpush2.msra.mxu0 0.0
    %140 = vmatprep.subr.mxu0 0.0
    %141 = vmatpush2.msra.mxu0 0.0
    %142 = vmatprep.subr.mxu0 0.0
    %143 = vmatpush2.msra.mxu0 0.0
    %144 = vmatprep.subr.mxu0 0.0
    %145 = vmatpush2.msra.mxu0 0.0
    %146 = vmatprep.subr.mxu0 0.0
    %147 = vmatpush2.msra.mxu0 0.0
    %148 = vmatprep.subr.mxu0 0.0
    %149 = vmatpush2.msra.mxu0 0.0
    %150 = vmatprep.subr.mxu0 0.0
    %151 = vmatpush2.msra.mxu0 0.0
    %152 = vmatprep.subr.mxu0 0.0
    %153 = vmatpush2.msra.mxu0 0.0
    %154 = vmatprep.subr.mxu0 0.0
    %155 = vmatpush2.msra.mxu0 0.0
    %156 = vmatprep.subr.mxu0 0.0
    %157 = vmatpush2.msra.mxu0 0.0
    %158 = vmatprep.subr.mxu0 0.0
    %159 = vmatpush2.msra.mxu0 0.0
    %160 = vmatprep.subr.mxu0 0.0
    %161 = vmatpush2.msra.mxu0 0.0
    %162 = vmatprep.subr.mxu0 0.0
    %163 = vmatpush2.msra.mxu0 0.0
    %164 = vmatprep.subr.mxu0 0.0
    %165 = vmatpush2.msra.mxu0 0.0
    %166 = vmatprep.mubr.f32.mxu0 0.0
    %167 = vmatmul.mubr.f32.gmra.mxu0 %v97
    %v168 = vpop.f32.mrf.mxu0
    %v169 = vadd.f32 %v88, %v168
    %v170 = vpop.f32.mrf.mxu0
    %v171 = vadd.f32 %v92, %v170
    %172 = vmatprep.mubr.f32.mxu0 0.0
    %173 = vmatmul.mubr.f32.gmra.mxu0 %v100
    %v174 = vpop.f32.mrf.mxu0
    %v175 = vadd.f32 %v88, %v174
    %v176 = vpop.f32.mrf.mxu0
    %v177 = vadd.f32 %v92, %v176
    %178 = vdwg.mxu0
    %v179 = vld [vmem:[%s3] sm:$0xff]
    %v180 = vld [vmem:[%s3 + $0x8] sm:$0xff]
    %v181 = vld [vmem:[%s3 + $0x10] sm:$0xff]
    %v182 = vld [vmem:[%s3 + $0x18] sm:$0xff]
    %v183 = vld [vmem:[%s4] sm:$0xff]
    %v184 = vld [vmem:[%s4 + $0x8] sm:$0xff]
    %v185 = vld [vmem:[%s4 + $0x10] sm:$0xff]
    %v186 = vld [vmem:[%s4 + $0x18] sm:$0xff]
    %v187 = vld [vmem:[%s6] sm:$0x1]
    %v188 = vld [vmem:[%s7] sm:$0x1]
    %v190 = vsel %vm95, 0.0, 0
    %192 = vmatprep.subr.mxu0 0.0
    %193 = vmatpush1.msra.mxu0 0.0
    %194 = vmatprep.subr.mxu0 0.0
    %195 = vmatpush1.msra.mxu0 0.0
    %196 = vmatprep.subr.mxu0 0.0
    %197 = vmatpush1.msra.mxu0 0.0
    %198 = vmatprep.subr.mxu0 0.0
    %199 = vmatpush1.msra.mxu0 0.0
    %200 = vmatprep.subr.mxu0 0.0
    %201 = vmatpush1.msra.mxu0 0.0
    %202 = vmatprep.subr.mxu0 0.0
    %203 = vmatpush1.msra.mxu0 0.0
    %204 = vmatprep.subr.mxu0 0.0
    %205 = vmatpush1.msra.mxu0 0.0
    %206 = vmatprep.subr.mxu0 0.0
    %207 = vmatpush1.msra.mxu0 0.0
    %208 = vmatprep.subr.mxu0 0.0
    %209 = vmatpush1.msra.mxu0 0.0
    %210 = vmatprep.subr.mxu0 0.0
    %211 = vmatpush1.msra.mxu0 0.0
    %212 = vmatprep.subr.mxu0 0.0
    %213 = vmatpush1.msra.mxu0 0.0
    %214 = vmatprep.subr.mxu0 0.0
    %215 = vmatpush1.msra.mxu0 0.0
    %216 = vmatprep.subr.mxu0 0.0
    %217 = vmatpush1.msra.mxu0 %v182
    %218 = vmatprep.subr.mxu0 0.0
    %219 = vmatpush1.msra.mxu0 %v181
    %220 = vmatprep.subr.mxu0 0.0
    %221 = vmatpush1.msra.mxu0 %v180
    %222 = vmatprep.subr.mxu0 0.0
    %223 = vmatpush1.msra.mxu0 %v179
    %224 = vmatprep.subr.mxu0 0.0
    %225 = vmatpush2.msra.mxu0 0.0
    %226 = vmatprep.subr.mxu0 0.0
    %227 = vmatpush2.msra.mxu0 0.0
    %228 = vmatprep.subr.mxu0 0.0
    %229 = vmatpush2.msra.mxu0 0.0
    %230 = vmatprep.subr.mxu0 0.0
    %231 = vmatpush2.msra.mxu0 0.0
    %232 = vmatprep.subr.mxu0 0.0
    %233 = vmatpush2.msra.mxu0 0.0
    %234 = vmatprep.subr.mxu0 0.0
    %235 = vmatpush2.msra.mxu0 0.0
    %236 = vmatprep.subr.mxu0 0.0
    %237 = vmatpush2.msra.mxu0 0.0
    %238 = vmatprep.subr.mxu0 0.0
    %239 = vmatpush2.msra.mxu0 0.0
    %240 = vmatprep.subr.mxu0 0.0
    %241 = vmatpush2.msra.mxu0 0.0
    %242 = vmatprep.subr.mxu0 0.0
    %243 = vmatpush2.msra.mxu0 0.0
    %244 = vmatprep.subr.mxu0 0.0
    %245 = vmatpush2.msra.mxu0 0.0
    %246 = vmatprep.subr.mxu0 0.0
    %247 = vmatpush2.msra.mxu0 0.0
    %248 = vmatprep.subr.mxu0 0.0
    %249 = vmatpush2.msra.mxu0 0.0
    %250 = vmatprep.subr.mxu0 0.0
    %251 = vmatpush2.msra.mxu0 0.0
    %252 = vmatprep.subr.mxu0 0.0
    %253 = vmatpush2.msra.mxu0 0.0
    %254 = vmatprep.subr.mxu0 0.0
    %255 = vmatpush2.msra.mxu0 0.0
    %256 = vmatprep.mubr.f32.mxu0 0.0
    %257 = vmatmul.mubr.f32.gmra.mxu0 %v190
    %v258 = vpop.f32.mrf.mxu0
    %v259 = vadd.f32 0.0, %v258
    %v260 = vpop.f32.mrf.mxu0
    %261 = vdwg.mxu0
    %262 = vmatprep.subr.mxu0 0.0
    %263 = vmatpush1.msra.mxu0 0.0
    %264 = vmatprep.subr.mxu0 0.0
    %265 = vmatpush1.msra.mxu0 0.0
    %266 = vmatprep.subr.mxu0 0.0
    %267 = vmatpush1.msra.mxu0 0.0
    %268 = vmatprep.subr.mxu0 0.0
    %269 = vmatpush1.msra.mxu0 0.0
    %270 = vmatprep.subr.mxu0 0.0
    %271 = vmatpush1.msra.mxu0 0.0
    %272 = vmatprep.subr.mxu0 0.0
    %273 = vmatpush1.msra.mxu0 0.0
    %274 = vmatprep.subr.mxu0 0.0
    %275 = vmatpush1.msra.mxu0 0.0
    %276 = vmatprep.subr.mxu0 0.0
    %277 = vmatpush1.msra.mxu0 0.0
    %278 = vmatprep.subr.mxu0 0.0
    %279 = vmatpush1.msra.mxu0 0.0
    %280 = vmatprep.subr.mxu0 0.0
    %281 = vmatpush1.msra.mxu0 0.0
    %282 = vmatprep.subr.mxu0 0.0
    %283 = vmatpush1.msra.mxu0 0.0
    %284 = vmatprep.subr.mxu0 0.0
    %285 = vmatpush1.msra.mxu0 0.0
    %286 = vmatprep.subr.mxu0 0.0
    %287 = vmatpush1.msra.mxu0 %v186
    %288 = vmatprep.subr.mxu0 0.0
    %289 = vmatpush1.msra.mxu0 %v185
    %290 = vmatprep.subr.mxu0 0.0
    %291 = vmatpush1.msra.mxu0 %v184
    %292 = vmatprep.subr.mxu0 0.0
    %293 = vmatpush1.msra.mxu0 %v183
    %294 = vmatprep.subr.mxu0 0.0
    %295 = vmatpush2.msra.mxu0 0.0
    %296 = vmatprep.subr.mxu0 0.0
    %297 = vmatpush2.msra.mxu0 0.0
    %298 = vmatprep.subr.mxu0 0.0
    %299 = vmatpush2.msra.mxu0 0.0
    %300 = vmatprep.subr.mxu0 0.0
    %301 = vmatpush2.msra.mxu0 0.0
    %302 = vmatprep.subr.mxu0 0.0
    %303 = vmatpush2.msra.mxu0 0.0
    %304 = vmatprep.subr.mxu0 0.0
    %305 = vmatpush2.msra.mxu0 0.0
    %306 = vmatprep.subr.mxu0 0.0
    %307 = vmatpush2.msra.mxu0 0.0
    %308 = vmatprep.subr.mxu0 0.0
    %309 = vmatpush2.msra.mxu0 0.0
    %310 = vmatprep.subr.mxu0 0.0
    %311 = vmatpush2.msra.mxu0 0.0
    %312 = vmatprep.subr.mxu0 0.0
    %313 = vmatpush2.msra.mxu0 0.0
    %314 = vmatprep.subr.mxu0 0.0
    %315 = vmatpush2.msra.mxu0 0.0
    %316 = vmatprep.subr.mxu0 0.0
    %317 = vmatpush2.msra.mxu0 0.0
    %318 = vmatprep.subr.mxu0 0.0
    %319 = vmatpush2.msra.mxu0 0.0
    %320 = vmatprep.subr.mxu0 0.0
    %321 = vmatpush2.msra.mxu0 0.0
    %322 = vmatprep.subr.mxu0 0.0
    %323 = vmatpush2.msra.mxu0 0.0
    %324 = vmatprep.subr.mxu0 0.0
    %325 = vmatpush2.msra.mxu0 0.0
    %326 = vmatprep.mubr.f32.mxu0 0.0
    %327 = vmatmul.mubr.f32.gmra.mxu0 %v190
    %v328 = vpop.f32.mrf.mxu0
    %v329 = vadd.f32 0.0, %v328
    %v330 = vpop.f32.mrf.mxu0
    %331 = vdwg.mxu0
    %v332 = vadd.f32 %v169, %v259
    %v333 = vxor.u32 %v332, 2147483648
    %v334 = vmul.f32 %v333, 1.442695
    %v335 = vpow.pop %v334
    %v336 = vadd.f32 %v335, 1.0
    %v337 = vrcp.pop %v336
    %v338 = vmul.f32 1.0, %v337
    %v340 = vlaneseq
    %v341 = vshrl.u32 %v340, 7
    %v342 = vsub.s32 0, %v341
    %v343 = vrot.slane %v187, %v342
    %344 = vrot.lane.b32.xlu0 %v343, 64
    %v345 = vpop.permute.xlu0 %344
    %v347 = vadd.f32 %v259, %v345
    %349 = vrot.lane.b32.xlu0 %v347, 64
    %v350 = vpop.permute.xlu0 %349
    %v352 = vmul.f32 %v338, %v350
    %354 = vrot.lane.b32.xlu0 %v352, 64
    %v355 = vpop.permute.xlu0 %354
    %v357 = vadd.f32 %v169, %v355
    %v358 = vtanh.pop %v357
    %v359 = vsub.f32 1.0, %v338
    %361 = vrot.lane.b32.xlu0 %v358, 96
    %v362 = vpop.permute.xlu0 %361
    %v364 = vmul.f32 %v359, %v362
    %v365 = vmul.f32 %v338, 0.0
    %v366 = vadd.f32 %v364, %v365
    %368 = vrot.lane.b32.xlu0 %v329, 96
    %v369 = vpop.permute.xlu0 %368
    %v371 = vadd.f32 %v175, %v369
    %v372 = vxor.u32 %v371, 2147483648
    %v373 = vmul.f32 %v372, 1.442695
    %v374 = vpow.pop %v373
    %v375 = vadd.f32 %v374, 1.0
    %v376 = vrcp.pop %v375
    %v377 = vmul.f32 1.0, %v376
    %v378 = vadd.f32 %v177, %v369
    %v379 = vxor.u32 %v378, 2147483648
    %v380 = vmul.f32 %v379, 1.442695
    %v381 = vpow.pop %v380
    %v382 = vadd.f32 %v381, 1.0
    %v383 = vrcp.pop %v382
    %v384 = vmul.f32 1.0, %v383
    %v386 = vlaneseq
    %v387 = vshrl.u32 %v386, 7
    %v388 = vsub.s32 0, %v387
    %v389 = vrot.slane %v188, %v388
    %390 = vrot.lane.b32.xlu0 %v389, 64
    %v391 = vpop.permute.xlu0 %390
    %v393 = vadd.f32 %v329, %v391
    %395 = vrot.lane.b32.xlu0 %v393, 32
    %v396 = vpop.permute.xlu0 %395
    %v398 = vmul.f32 %v377, %v396
    %400 = vrot.lane.b32.xlu0 %v398, 64
    %v401 = vpop.permute.xlu0 %400
    %v403 = vadd.f32 %v177, %v401
    %v404 = vtanh.pop %v403
    %v405 = vsub.f32 1.0, %v384
    %407 = vrot.lane.b32.xlu0 %v404, 96
    %v408 = vpop.permute.xlu0 %407
    %v410 = vmul.f32 %v405, %v408
    %v411 = vmul.f32 %v384, 0.0
    %v412 = vadd.f32 %v410, %v411
    %414 = vrot.lane.b32.xlu0 %v366, 96
    %v415 = vpop.permute.xlu0 %414
    %417 = vst.msk [vmem:[#allocation2] sm:$0xff] %vm95, %v415
    %418 = vst.msk [vmem:[#allocation3 + $0x8] sm:$0xff] %vm95, %v412
    %v419 = vsel %vm95, %v415, 0
    %421 = vmatprep.subr.mxu0 0.0
    %422 = vmatpush1.msra.mxu0 0.0
    %423 = vmatprep.subr.mxu0 0.0
    %424 = vmatpush1.msra.mxu0 0.0
    %425 = vmatprep.subr.mxu0 0.0
    %426 = vmatpush1.msra.mxu0 0.0
    %427 = vmatprep.subr.mxu0 0.0
    %428 = vmatpush1.msra.mxu0 0.0
    %429 = vmatprep.subr.mxu0 0.0
    %430 = vmatpush1.msra.mxu0 0.0
    %431 = vmatprep.subr.mxu0 0.0
    %432 = vmatpush1.msra.mxu0 0.0
    %433 = vmatprep.subr.mxu0 0.0
    %434 = vmatpush1.msra.mxu0 0.0
    %435 = vmatprep.subr.mxu0 0.0
    %436 = vmatpush1.msra.mxu0 0.0
    %437 = vmatprep.subr.mxu0 0.0
    %438 = vmatpush1.msra.mxu0 0.0
    %439 = vmatprep.subr.mxu0 0.0
    %440 = vmatpush1.msra.mxu0 0.0
    %441 = vmatprep.subr.mxu0 0.0
    %442 = vmatpush1.msra.mxu0 0.0
    %443 = vmatprep.subr.mxu0 0.0
    %444 = vmatpush1.msra.mxu0 0.0
    %445 = vmatprep.subr.mxu0 0.0
    %446 = vmatpush1.msra.mxu0 %v182
    %447 = vmatprep.subr.mxu0 0.0
    %448 = vmatpush1.msra.mxu0 %v181
    %449 = vmatprep.subr.mxu0 0.0
    %450 = vmatpush1.msra.mxu0 %v180
    %451 = vmatprep.subr.mxu0 0.0
    %452 = vmatpush1.msra.mxu0 %v179
    %453 = vmatprep.subr.mxu0 0.0
    %454 = vmatpush2.msra.mxu0 0.0
    %455 = vmatprep.subr.mxu0 0.0
    %456 = vmatpush2.msra.mxu0 0.0
    %457 = vmatprep.subr.mxu0 0.0
    %458 = vmatpush2.msra.mxu0 0.0
    %459 = vmatprep.subr.mxu0 0.0
    %460 = vmatpush2.msra.mxu0 0.0
    %461 = vmatprep.subr.mxu0 0.0
    %462 = vmatpush2.msra.mxu0 0.0
    %463 = vmatprep.subr.mxu0 0.0
    %464 = vmatpush2.msra.mxu0 0.0
    %465 = vmatprep.subr.mxu0 0.0
    %466 = vmatpush2.msra.mxu0 0.0
    %467 = vmatprep.subr.mxu0 0.0
    %468 = vmatpush2.msra.mxu0 0.0
    %469 = vmatprep.subr.mxu0 0.0
    %470 = vmatpush2.msra.mxu0 0.0
    %471 = vmatprep.subr.mxu0 0.0
    %472 = vmatpush2.msra.mxu0 0.0
    %473 = vmatprep.subr.mxu0 0.0
    %474 = vmatpush2.msra.mxu0 0.0
    %475 = vmatprep.subr.mxu0 0.0
    %476 = vmatpush2.msra.mxu0 0.0
    %477 = vmatprep.subr.mxu0 0.0
    %478 = vmatpush2.msra.mxu0 0.0
    %479 = vmatprep.subr.mxu0 0.0
    %480 = vmatpush2.msra.mxu0 0.0
    %481 = vmatprep.subr.mxu0 0.0
    %482 = vmatpush2.msra.mxu0 0.0
    %483 = vmatprep.subr.mxu0 0.0
    %484 = vmatpush2.msra.mxu0 0.0
    %485 = vmatprep.mubr.f32.mxu0 0.0
    %486 = vmatmul.mubr.f32.gmra.mxu0 %v419
    %v487 = vpop.f32.mrf.mxu0
    %v488 = vadd.f32 0.0, %v487
    %v489 = vpop.f32.mrf.mxu0
    %490 = vdwg.mxu0
    %v492 = vsel %vm95, %v412, 0
    %494 = vmatprep.subr.mxu0 0.0
    %495 = vmatpush1.msra.mxu0 0.0
    %496 = vmatprep.subr.mxu0 0.0
    %497 = vmatpush1.msra.mxu0 0.0
    %498 = vmatprep.subr.mxu0 0.0
    %499 = vmatpush1.msra.mxu0 0.0
    %500 = vmatprep.subr.mxu0 0.0
    %501 = vmatpush1.msra.mxu0 0.0
    %502 = vmatprep.subr.mxu0 0.0
    %503 = vmatpush1.msra.mxu0 0.0
    %504 = vmatprep.subr.mxu0 0.0
    %505 = vmatpush1.msra.mxu0 0.0
    %506 = vmatprep.subr.mxu0 0.0
    %507 = vmatpush1.msra.mxu0 0.0
    %508 = vmatprep.subr.mxu0 0.0
    %509 = vmatpush1.msra.mxu0 0.0
    %510 = vmatprep.subr.mxu0 0.0
    %511 = vmatpush1.msra.mxu0 0.0
    %512 = vmatprep.subr.mxu0 0.0
    %513 = vmatpush1.msra.mxu0 0.0
    %514 = vmatprep.subr.mxu0 0.0
    %515 = vmatpush1.msra.mxu0 0.0
    %516 = vmatprep.subr.mxu0 0.0
    %517 = vmatpush1.msra.mxu0 0.0
    %518 = vmatprep.subr.mxu0 0.0
    %519 = vmatpush1.msra.mxu0 %v186
    %520 = vmatprep.subr.mxu0 0.0
    %521 = vmatpush1.msra.mxu0 %v185
    %522 = vmatprep.subr.mxu0 0.0
    %523 = vmatpush1.msra.mxu0 %v184
    %524 = vmatprep.subr.mxu0 0.0
    %525 = vmatpush1.msra.mxu0 %v183
    %526 = vmatprep.subr.mxu0 0.0
    %527 = vmatpush2.msra.mxu0 0.0
    %528 = vmatprep.subr.mxu0 0.0
    %529 = vmatpush2.msra.mxu0 0.0
    %530 = vmatprep.subr.mxu0 0.0
    %531 = vmatpush2.msra.mxu0 0.0
    %532 = vmatprep.subr.mxu0 0.0
    %533 = vmatpush2.msra.mxu0 0.0
    %534 = vmatprep.subr.mxu0 0.0
    %535 = vmatpush2.msra.mxu0 0.0
    %536 = vmatprep.subr.mxu0 0.0
    %537 = vmatpush2.msra.mxu0 0.0
    %538 = vmatprep.subr.mxu0 0.0
    %539 = vmatpush2.msra.mxu0 0.0
    %540 = vmatprep.subr.mxu0 0.0
    %541 = vmatpush2.msra.mxu0 0.0
    %542 = vmatprep.subr.mxu0 0.0
    %543 = vmatpush2.msra.mxu0 0.0
    %544 = vmatprep.subr.mxu0 0.0
    %545 = vmatpush2.msra.mxu0 0.0
    %546 = vmatprep.subr.mxu0 0.0
    %547 = vmatpush2.msra.mxu0 0.0
    %548 = vmatprep.subr.mxu0 0.0
    %549 = vmatpush2.msra.mxu0 0.0
    %550 = vmatprep.subr.mxu0 0.0
    %551 = vmatpush2.msra.mxu0 0.0
    %552 = vmatprep.subr.mxu0 0.0
    %553 = vmatpush2.msra.mxu0 0.0
    %554 = vmatprep.subr.mxu0 0.0
    %555 = vmatpush2.msra.mxu0 0.0
    %556 = vmatprep.subr.mxu0 0.0
    %557 = vmatpush2.msra.mxu0 0.0
    %558 = vmatprep.mubr.f32.mxu0 0.0
    %559 = vmatmul.mubr.f32.gmra.mxu0 %v492
    %v560 = vpop.f32.mrf.mxu0
    %v561 = vadd.f32 0.0, %v560
    %v562 = vpop.f32.mrf.mxu0
    %563 = vdwg.mxu0
    %v564 = vadd.f32 %v175, %v488
    %v565 = vxor.u32 %v564, 2147483648
    %v566 = vmul.f32 %v565, 1.442695
    %v567 = vpow.pop %v566
    %v568 = vadd.f32 %v567, 1.0
    %v569 = vrcp.pop %v568
    %v570 = vmul.f32 1.0, %v569
    %v571 = vadd.f32 %v488, %v345
    %573 = vrot.lane.b32.xlu0 %v571, 64
    %v574 = vpop.permute.xlu0 %573
    %v576 = vmul.f32 %v570, %v574
    %578 = vrot.lane.b32.xlu0 %v576, 64
    %v579 = vpop.permute.xlu0 %578
    %v581 = vadd.f32 %v175, %v579
    %v582 = vtanh.pop %v581
    %v583 = vsub.f32 1.0, %v570
    %585 = vrot.lane.b32.xlu0 %v582, 96
    %v586 = vpop.permute.xlu0 %585
    %v588 = vmul.f32 %v583, %v586
    %v589 = vmul.f32 %v570, %v366
    %v590 = vadd.f32 %v588, %v589
    %592 = vrot.lane.b32.xlu0 %v561, 96
    %v593 = vpop.permute.xlu0 %592
    %v595 = vadd.f32 %v169, %v593
    %v596 = vxor.u32 %v595, 2147483648
    %v597 = vmul.f32 %v596, 1.442695
    %v598 = vpow.pop %v597
    %v599 = vadd.f32 %v598, 1.0
    %v600 = vrcp.pop %v599
    %v601 = vmul.f32 1.0, %v600
    %v602 = vadd.f32 %v171, %v593
    %v603 = vxor.u32 %v602, 2147483648
    %v604 = vmul.f32 %v603, 1.442695
    %v605 = vpow.pop %v604
    %v606 = vadd.f32 %v605, 1.0
    %v607 = vrcp.pop %v606
    %v608 = vmul.f32 1.0, %v607
    %v609 = vadd.f32 %v561, %v391
    %611 = vrot.lane.b32.xlu0 %v609, 32
    %v612 = vpop.permute.xlu0 %611
    %v614 = vmul.f32 %v601, %v612
    %616 = vrot.lane.b32.xlu0 %v614, 64
    %v617 = vpop.permute.xlu0 %616
    %v619 = vadd.f32 %v171, %v617
    %v620 = vtanh.pop %v619
    %v621 = vsub.f32 1.0, %v608
    %623 = vrot.lane.b32.xlu0 %v620, 96
    %v624 = vpop.permute.xlu0 %623
    %v626 = vmul.f32 %v621, %v624
    %v627 = vmul.f32 %v608, %v412
    %v628 = vadd.f32 %v626, %v627
    %630 = vrot.lane.b32.xlu0 %v590, 96
    %v631 = vpop.permute.xlu0 %630
    %633 = vst.msk [vmem:[#allocation2 + $0x8] sm:$0xff] %vm95, %v631
    %634 = vst.msk [vmem:[#allocation3] sm:$0xff] %vm95, %v628
    %s635 = sld [smem:[#allocation4]]
    %s636 = ssub.s32 %s635, 1
    %s637 = scalar_lea.vmem [#allocation2], %s636
    %v638 = vld [vmem:[%s637] sm:$0x1]
    %s639 = scalar_lea.vmem [#allocation3], %s636
    %v640 = vld [vmem:[%s639] sm:$0x1]
    %s641 = sld [smem:[#allocation4 + $0x1]]
    %s642 = sadd.s32 %s641, 7
    %s643 = scalar_lea.vmem [#allocation2], %s642
    %v644 = vld [vmem:[%s643] sm:$0x1]
    %s645 = scalar_lea.vmem [#allocation3], %s642
    %v646 = vld [vmem:[%s645] sm:$0x1]
    %v648 = vrot.slane %v644, 7
    %vm650 = vcmask 1040384
    %v651 = vsel %vm650, %v638, %v648
    %v653 = vrot.slane %v646, 7
    %v655 = vsel %vm650, %v640, %v653
    %v656 = vld [vmem:[%s8] sm:$0xff]
    %v657 = vld [vmem:[%s8 + $0x8] sm:$0xff]
    %v658 = vld [vmem:[%s8 + $0x10] sm:$0xff]
    %v659 = vld [vmem:[%s8 + $0x18] sm:$0xff]
    %v660 = vld [vmem:[%s8 + $0x20] sm:$0xff]
    %v661 = vld [vmem:[%s8 + $0x28] sm:$0xff]
    %v662 = vld [vmem:[%s8 + $0x30] sm:$0xff]
    %v663 = vld [vmem:[%s8 + $0x38] sm:$0xff]
    %v665 = vsel %vm95, %v655, 0
    %667 = vmatprep.subr.mxu0 0.0
    %668 = vmatpush1.msra.mxu0 0.0
    %669 = vmatprep.subr.mxu0 0.0
    %670 = vmatpush1.msra.mxu0 0.0
    %671 = vmatprep.subr.mxu0 0.0
    %672 = vmatpush1.msra.mxu0 0.0
    %673 = vmatprep.subr.mxu0 0.0
    %674 = vmatpush1.msra.mxu0 0.0
    %675 = vmatprep.subr.mxu0 0.0
    %676 = vmatpush1.msra.mxu0 0.0
    %677 = vmatprep.subr.mxu0 0.0
    %678 = vmatpush1.msra.mxu0 0.0
    %679 = vmatprep.subr.mxu0 0.0
    %680 = vmatpush1.msra.mxu0 0.0
    %681 = vmatprep.subr.mxu0 0.0
    %682 = vmatpush1.msra.mxu0 0.0
    %683 = vmatprep.subr.mxu0 0.0
    %684 = vmatpush1.msra.mxu0 0.0
    %685 = vmatprep.subr.mxu0 0.0
    %686 = vmatpush1.msra.mxu0 0.0
    %687 = vmatprep.subr.mxu0 0.0
    %688 = vmatpush1.msra.mxu0 0.0
    %689 = vmatprep.subr.mxu0 0.0
    %690 = vmatpush1.msra.mxu0 0.0
    %691 = vmatprep.subr.mxu0 0.0
    %692 = vmatpush1.msra.mxu0 %v663
    %693 = vmatprep.subr.mxu0 0.0
    %694 = vmatpush1.msra.mxu0 %v662
    %695 = vmatprep.subr.mxu0 0.0
    %696 = vmatpush1.msra.mxu0 %v661
    %697 = vmatprep.subr.mxu0 0.0
    %698 = vmatpush1.msra.mxu0 %v660
    %699 = vmatprep.subr.mxu0 0.0
    %700 = vmatpush2.msra.mxu0 0.0
    %701 = vmatprep.subr.mxu0 0.0
    %702 = vmatpush2.msra.mxu0 0.0
    %703 = vmatprep.subr.mxu0 0.0
    %704 = vmatpush2.msra.mxu0 0.0
    %705 = vmatprep.subr.mxu0 0.0
    %706 = vmatpush2.msra.mxu0 0.0
    %707 = vmatprep.subr.mxu0 0.0
    %708 = vmatpush2.msra.mxu0 0.0
    %709 = vmatprep.subr.mxu0 0.0
    %710 = vmatpush2.msra.mxu0 0.0
    %711 = vmatprep.subr.mxu0 0.0
    %712 = vmatpush2.msra.mxu0 0.0
    %713 = vmatprep.subr.mxu0 0.0
    %714 = vmatpush2.msra.mxu0 0.0
    %715 = vmatprep.subr.mxu0 0.0
    %716 = vmatpush2.msra.mxu0 0.0
    %717 = vmatprep.subr.mxu0 0.0
    %718 = vmatpush2.msra.mxu0 0.0
    %719 = vmatprep.subr.mxu0 0.0
    %720 = vmatpush2.msra.mxu0 0.0
    %721 = vmatprep.subr.mxu0 0.0
    %722 = vmatpush2.msra.mxu0 0.0
    %723 = vmatprep.subr.mxu0 0.0
    %724 = vmatpush2.msra.mxu0 0.0
    %725 = vmatprep.subr.mxu0 0.0
    %726 = vmatpush2.msra.mxu0 0.0
    %727 = vmatprep.subr.mxu0 0.0
    %728 = vmatpush2.msra.mxu0 0.0
    %729 = vmatprep.subr.mxu0 0.0
    %730 = vmatpush2.msra.mxu0 0.0
    %731 = vmatprep.mubr.f32.mxu0 0.0
    %732 = vmatmul.mubr.f32.gmra.mxu0 %v665
    %v733 = vpop.f32.mrf.mxu0
    %v734 = vadd.f32 0.0, %v733
    %v735 = vpop.f32.mrf.mxu0
    %736 = vdwg.mxu0
    %v738 = vsel %vm95, %v651, 0
    %740 = vmatprep.subr.mxu0 0.0
    %741 = vmatpush1.msra.mxu0 0.0
    %742 = vmatprep.subr.mxu0 0.0
    %743 = vmatpush1.msra.mxu0 0.0
    %744 = vmatprep.subr.mxu0 0.0
    %745 = vmatpush1.msra.mxu0 0.0
    %746 = vmatprep.subr.mxu0 0.0
    %747 = vmatpush1.msra.mxu0 0.0
    %748 = vmatprep.subr.mxu0 0.0
    %749 = vmatpush1.msra.mxu0 0.0
    %750 = vmatprep.subr.mxu0 0.0
    %751 = vmatpush1.msra.mxu0 0.0
    %752 = vmatprep.subr.mxu0 0.0
    %753 = vmatpush1.msra.mxu0 0.0
    %754 = vmatprep.subr.mxu0 0.0
    %755 = vmatpush1.msra.mxu0 0.0
    %756 = vmatprep.subr.mxu0 0.0
    %757 = vmatpush1.msra.mxu0 0.0
    %758 = vmatprep.subr.mxu0 0.0
    %759 = vmatpush1.msra.mxu0 0.0
    %760 = vmatprep.subr.mxu0 0.0
    %761 = vmatpush1.msra.mxu0 0.0
    %762 = vmatprep.subr.mxu0 0.0
    %763 = vmatpush1.msra.mxu0 0.0
    %764 = vmatprep.subr.mxu0 0.0
    %765 = vmatpush1.msra.mxu0 %v659
    %766 = vmatprep.subr.mxu0 0.0
    %767 = vmatpush1.msra.mxu0 %v658
    %768 = vmatprep.subr.mxu0 0.0
    %769 = vmatpush1.msra.mxu0 %v657
    %770 = vmatprep.subr.mxu0 0.0
    %771 = vmatpush1.msra.mxu0 %v656
    %772 = vmatprep.subr.mxu0 0.0
    %773 = vmatpush2.msra.mxu0 0.0
    %774 = vmatprep.subr.mxu0 0.0
    %775 = vmatpush2.msra.mxu0 0.0
    %776 = vmatprep.subr.mxu0 0.0
    %777 = vmatpush2.msra.mxu0 0.0
    %778 = vmatprep.subr.mxu0 0.0
    %779 = vmatpush2.msra.mxu0 0.0
    %780 = vmatprep.subr.mxu0 0.0
    %781 = vmatpush2.msra.mxu0 0.0
    %782 = vmatprep.subr.mxu0 0.0
    %783 = vmatpush2.msra.mxu0 0.0
    %784 = vmatprep.subr.mxu0 0.0
    %785 = vmatpush2.msra.mxu0 0.0
    %786 = vmatprep.subr.mxu0 0.0
    %787 = vmatpush2.msra.mxu0 0.0
    %788 = vmatprep.subr.mxu0 0.0
    %789 = vmatpush2.msra.mxu0 0.0
    %790 = vmatprep.subr.mxu0 0.0
    %791 = vmatpush2.msra.mxu0 0.0
    %792 = vmatprep.subr.mxu0 0.0
    %793 = vmatpush2.msra.mxu0 0.0
    %794 = vmatprep.subr.mxu0 0.0
    %795 = vmatpush2.msra.mxu0 0.0
    %796 = vmatprep.subr.mxu0 0.0
    %797 = vmatpush2.msra.mxu0 0.0
    %798 = vmatprep.subr.mxu0 0.0
    %799 = vmatpush2.msra.mxu0 0.0
    %800 = vmatprep.subr.mxu0 0.0
    %801 = vmatpush2.msra.mxu0 0.0
    %802 = vmatprep.subr.mxu0 0.0
    %803 = vmatpush2.msra.mxu0 0.0
    %804 = vmatprep.mubr.f32.mxu0 0.0
    %805 = vmatmul.mubr.f32.gmra.mxu0 %v738
    %v806 = vpop.f32.mrf.mxu0
    %v807 = vadd.f32 %v734, %v806
    %v808 = vpop.f32.mrf.mxu0
    %809 = vdwg.mxu0
    %v810 = vld [vmem:[%s9] sm:$0x1]
    %v812 = vlaneseq
    %v813 = vshrl.u32 %v812, 7
    %v814 = vsub.s32 0, %v813
    %v815 = vrot.slane %v810, %v814
    %v817 = vadd.f32 %v807, %v815
    %v818 = vtanh.pop %v817
    %v819 = vld [vmem:[%s10] sm:$0xff]
    %v820 = vld [vmem:[%s10 + $0x8] sm:$0xff]
    %v821 = vld [vmem:[%s11] sm:$0x1]
    %v823 = vlaneseq
    %v824 = vshrl.u32 %v823, 7
    %v825 = vsub.s32 0, %v824
    %v826 = vrot.slane %v821, %v825
    %vm828 = vcmask 130048
    %v830 = vsel %vm828, %v818, 0
    %832 = vmatprep.subr.mxu0 0.0
    %833 = vmatpush1.msra.mxu0 0.0
    %834 = vmatprep.subr.mxu0 0.0
    %835 = vmatpush1.msra.mxu0 0.0
    %836 = vmatprep.subr.mxu0 0.0
    %837 = vmatpush1.msra.mxu0 0.0
    %838 = vmatprep.subr.mxu0 0.0
    %839 = vmatpush1.msra.mxu0 0.0
    %840 = vmatprep.subr.mxu0 0.0
    %841 = vmatpush1.msra.mxu0 0.0
    %842 = vmatprep.subr.mxu0 0.0
    %843 = vmatpush1.msra.mxu0 0.0
    %844 = vmatprep.subr.mxu0 0.0
    %845 = vmatpush1.msra.mxu0 0.0
    %846 = vmatprep.subr.mxu0 0.0
    %847 = vmatpush1.msra.mxu0 0.0
    %848 = vmatprep.subr.mxu0 0.0
    %849 = vmatpush1.msra.mxu0 0.0
    %850 = vmatprep.subr.mxu0 0.0
    %851 = vmatpush1.msra.mxu0 0.0
    %852 = vmatprep.subr.mxu0 0.0
    %853 = vmatpush1.msra.mxu0 0.0
    %854 = vmatprep.subr.mxu0 0.0
    %855 = vmatpush1.msra.mxu0 0.0
    %856 = vmatprep.subr.mxu0 0.0
    %857 = vmatpush1.msra.mxu0 0.0
    %858 = vmatprep.subr.mxu0 0.0
    %859 = vmatpush1.msra.mxu0 0.0
    %860 = vmatprep.subr.mxu0 0.0
    %861 = vmatpush1.msra.mxu0 %v820
    %862 = vmatprep.subr.mxu0 0.0
    %863 = vmatpush1.msra.mxu0 %v819
    %864 = vmatprep.subr.mxu0 0.0
    %865 = vmatpush2.msra.mxu0 0.0
    %866 = vmatprep.subr.mxu0 0.0
    %867 = vmatpush2.msra.mxu0 0.0
    %868 = vmatprep.subr.mxu0 0.0
    %869 = vmatpush2.msra.mxu0 0.0
    %870 = vmatprep.subr.mxu0 0.0
    %871 = vmatpush2.msra.mxu0 0.0
    %872 = vmatprep.subr.mxu0 0.0
    %873 = vmatpush2.msra.mxu0 0.0
    %874 = vmatprep.subr.mxu0 0.0
    %875 = vmatpush2.msra.mxu0 0.0
    %876 = vmatprep.subr.mxu0 0.0
    %877 = vmatpush2.msra.mxu0 0.0
    %878 = vmatprep.subr.mxu0 0.0
    %879 = vmatpush2.msra.mxu0 0.0
    %880 = vmatprep.subr.mxu0 0.0
    %881 = vmatpush2.msra.mxu0 0.0
    %882 = vmatprep.subr.mxu0 0.0
    %883 = vmatpush2.msra.mxu0 0.0
    %884 = vmatprep.subr.mxu0 0.0
    %885 = vmatpush2.msra.mxu0 0.0
    %886 = vmatprep.subr.mxu0 0.0
    %887 = vmatpush2.msra.mxu0 0.0
    %888 = vmatprep.subr.mxu0 0.0
    %889 = vmatpush2.msra.mxu0 0.0
    %890 = vmatprep.subr.mxu0 0.0
    %891 = vmatpush2.msra.mxu0 0.0
    %892 = vmatprep.subr.mxu0 0.0
    %893 = vmatpush2.msra.mxu0 0.0
    %894 = vmatprep.subr.mxu0 0.0
    %895 = vmatpush2.msra.mxu0 0.0
    %896 = vmatprep.mubr.f32.mxu0 0.0
    %897 = vmatmul.mubr.f32.gmra.mxu0 %v830
    %v898 = vpop.f32.mrf.mxu0
    %v899 = vadd.f32 %v826, %v898
    %v900 = vpop.f32.mrf.mxu0
    %901 = vdwg.mxu0
    %v902 = vld [vmem:[%s12] sm:$0xff]
    %v903 = vld [vmem:[%s12 + $0x8] sm:$0xff]
    %v904 = vld [vmem:[%s12 + $0x10] sm:$0xff]
    %v905 = vld [vmem:[%s12 + $0x18] sm:$0xff]
    %v906 = vld [vmem:[%s14] sm:$0x1]
    %v908 = vlaneseq
    %v909 = vshrl.u32 %v908, 7
    %v910 = vsub.s32 0, %v909
    %v911 = vrot.slane %v906, %v910
    %913 = vmatprep.subr.mxu0 0.0
    %914 = vmatpush1.msra.mxu0 0.0
    %915 = vmatprep.subr.mxu0 0.0
    %916 = vmatpush1.msra.mxu0 0.0
    %917 = vmatprep.subr.mxu0 0.0
    %918 = vmatpush1.msra.mxu0 0.0
    %919 = vmatprep.subr.mxu0 0.0
    %920 = vmatpush1.msra.mxu0 0.0
    %921 = vmatprep.subr.mxu0 0.0
    %922 = vmatpush1.msra.mxu0 0.0
    %923 = vmatprep.subr.mxu0 0.0
    %924 = vmatpush1.msra.mxu0 0.0
    %925 = vmatprep.subr.mxu0 0.0
    %926 = vmatpush1.msra.mxu0 0.0
    %927 = vmatprep.subr.mxu0 0.0
    %928 = vmatpush1.msra.mxu0 0.0
    %929 = vmatprep.subr.mxu0 0.0
    %930 = vmatpush1.msra.mxu0 0.0
    %931 = vmatprep.subr.mxu0 0.0
    %932 = vmatpush1.msra.mxu0 0.0
    %933 = vmatprep.subr.mxu0 0.0
    %934 = vmatpush1.msra.mxu0 0.0
    %935 = vmatprep.subr.mxu0 0.0
    %936 = vmatpush1.msra.mxu0 0.0
    %937 = vmatprep.subr.mxu0 0.0
    %938 = vmatpush1.msra.mxu0 %v905
    %939 = vmatprep.subr.mxu0 0.0
    %940 = vmatpush1.msra.mxu0 %v904
    %941 = vmatprep.subr.mxu0 0.0
    %942 = vmatpush1.msra.mxu0 %v903
    %943 = vmatprep.subr.mxu0 0.0
    %944 = vmatpush1.msra.mxu0 %v902
    %945 = vmatprep.subr.mxu0 0.0
    %946 = vmatpush2.msra.mxu0 0.0
    %947 = vmatprep.subr.mxu0 0.0
    %948 = vmatpush2.msra.mxu0 0.0
    %949 = vmatprep.subr.mxu0 0.0
    %950 = vmatpush2.msra.mxu0 0.0
    %951 = vmatprep.subr.mxu0 0.0
    %952 = vmatpush2.msra.mxu0 0.0
    %953 = vmatprep.subr.mxu0 0.0
    %954 = vmatpush2.msra.mxu0 0.0
    %955 = vmatprep.subr.mxu0 0.0
    %956 = vmatpush2.msra.mxu0 0.0
    %957 = vmatprep.subr.mxu0 0.0
    %958 = vmatpush2.msra.mxu0 0.0
    %959 = vmatprep.subr.mxu0 0.0
    %960 = vmatpush2.msra.mxu0 0.0
    %961 = vmatprep.subr.mxu0 0.0
    %962 = vmatpush2.msra.mxu0 0.0
    %963 = vmatprep.subr.mxu0 0.0
    %964 = vmatpush2.msra.mxu0 0.0
    %965 = vmatprep.subr.mxu0 0.0
    %966 = vmatpush2.msra.mxu0 0.0
    %967 = vmatprep.subr.mxu0 0.0
    %968 = vmatpush2.msra.mxu0 0.0
    %969 = vmatprep.subr.mxu0 0.0
    %970 = vmatpush2.msra.mxu0 0.0
    %971 = vmatprep.subr.mxu0 0.0
    %972 = vmatpush2.msra.mxu0 0.0
    %973 = vmatprep.subr.mxu0 0.0
    %974 = vmatpush2.msra.mxu0 0.0
    %975 = vmatprep.subr.mxu0 0.0
    %976 = vmatpush2.msra.mxu0 0.0
    %977 = vmatprep.mubr.f32.mxu0 0.0
    %978 = vmatmul.mubr.f32.gmra.mxu0 %v97
    %v979 = vpop.f32.mrf.mxu0
    %v980 = vadd.f32 %v911, %v979
    %v981 = vpop.f32.mrf.mxu0
    %982 = vmatprep.mubr.f32.mxu0 0.0
    %983 = vmatmul.mubr.f32.gmra.mxu0 %v100
    %v984 = vpop.f32.mrf.mxu0
    %v985 = vadd.f32 %v911, %v984
    %v986 = vpop.f32.mrf.mxu0
    %987 = vdwg.mxu0
    %v989 = vsel %vm95, %v899, 0
    %991 = vmatprep.subr.mxu0 0.0
    %992 = vmatpush1.msra.mxu0 0.0
    %993 = vmatprep.subr.mxu0 0.0
    %994 = vmatpush1.msra.mxu0 0.0
    %995 = vmatprep.subr.mxu0 0.0
    %996 = vmatpush1.msra.mxu0 0.0
    %997 = vmatprep.subr.mxu0 0.0
    %998 = vmatpush1.msra.mxu0 0.0
    %999 = vmatprep.subr.mxu0 0.0
    %1000 = vmatpush1.msra.mxu0 0.0
    %1001 = vmatprep.subr.mxu0 0.0
    %1002 = vmatpush1.msra.mxu0 0.0
    %1003 = vmatprep.subr.mxu0 0.0
    %1004 = vmatpush1.msra.mxu0 0.0
    %1005 = vmatprep.subr.mxu0 0.0
    %1006 = vmatpush1.msra.mxu0 0.0
    %1007 = vmatprep.subr.mxu0 0.0
    %1008 = vmatpush1.msra.mxu0 0.0
    %1009 = vmatprep.subr.mxu0 0.0
    %1010 = vmatpush1.msra.mxu0 0.0
    %1011 = vmatprep.subr.mxu0 0.0
    %1012 = vmatpush1.msra.mxu0 0.0
    %1013 = vmatprep.subr.mxu0 0.0
    %1014 = vmatpush1.msra.mxu0 0.0
    %1015 = vmatprep.subr.mxu0 0.0
    %1016 = vmatpush1.msra.mxu0 %v905
    %1017 = vmatprep.subr.mxu0 0.0
    %1018 = vmatpush1.msra.mxu0 %v904
    %1019 = vmatprep.subr.mxu0 0.0
    %1020 = vmatpush1.msra.mxu0 %v903
    %1021 = vmatprep.subr.mxu0 0.0
    %1022 = vmatpush1.msra.mxu0 %v902
    %1023 = vmatprep.subr.mxu0 0.0
    %1024 = vmatpush2.msra.mxu0 0.0
    %1025 = vmatprep.subr.mxu0 0.0
    %1026 = vmatpush2.msra.mxu0 0.0
    %1027 = vmatprep.subr.mxu0 0.0
    %1028 = vmatpush2.msra.mxu0 0.0
    %1029 = vmatprep.subr.mxu0 0.0
    %1030 = vmatpush2.msra.mxu0 0.0
    %1031 = vmatprep.subr.mxu0 0.0
    %1032 = vmatpush2.msra.mxu0 0.0
    %1033 = vmatprep.subr.mxu0 0.0
    %1034 = vmatpush2.msra.mxu0 0.0
    %1035 = vmatprep.subr.mxu0 0.0
    %1036 = vmatpush2.msra.mxu0 0.0
    %1037 = vmatprep.subr.mxu0 0.0
    %1038 = vmatpush2.msra.mxu0 0.0
    %1039 = vmatprep.subr.mxu0 0.0
    %1040 = vmatpush2.msra.mxu0 0.0
    %1041 = vmatprep.subr.mxu0 0.0
    %1042 = vmatpush2.msra.mxu0 0.0
    %1043 = vmatprep.subr.mxu0 0.0
    %1044 = vmatpush2.msra.mxu0 0.0
    %1045 = vmatprep.subr.mxu0 0.0
    %1046 = vmatpush2.msra.mxu0 0.0
    %1047 = vmatprep.subr.mxu0 0.0
    %1048 = vmatpush2.msra.mxu0 0.0
    %1049 = vmatprep.subr.mxu0 0.0
    %1050 = vmatpush2.msra.mxu0 0.0
    %1051 = vmatprep.subr.mxu0 0.0
    %1052 = vmatpush2.msra.mxu0 0.0
    %1053 = vmatprep.subr.mxu0 0.0
    %1054 = vmatpush2.msra.mxu0 0.0
    %1055 = vmatprep.mubr.f32.mxu0 0.0
    %1056 = vmatmul.mubr.f32.gmra.mxu0 %v989
    %v1057 = vpop.f32.mrf.mxu0
    %v1058 = vadd.f32 0.0, %v1057
    %v1059 = vpop.f32.mrf.mxu0
    %1060 = vdwg.mxu0
    %v1061 = vld [vmem:[%s13] sm:$0xff]
    %v1062 = vld [vmem:[%s13 + $0x8] sm:$0xff]
    %v1063 = vld [vmem:[%s13 + $0x10] sm:$0xff]
    %v1064 = vld [vmem:[%s13 + $0x18] sm:$0xff]
    %v1065 = vld [vmem:[%s15] sm:$0x1]
    %v1066 = vlaneseq
    %v1067 = vshrl.u32 %v1066, 7
    %v1068 = vsub.s32 0, %v1067
    %v1069 = vrot.slane %v1058, %v1068
    %v1070 = vadd.f32 %v980, %v1069
    %1071 = vmatprep.subr.mxu0 0.0
    %1072 = vmatpush1.msra.mxu0 0.0
    %1073 = vmatprep.subr.mxu0 0.0
    %1074 = vmatpush1.msra.mxu0 0.0
    %1075 = vmatprep.subr.mxu0 0.0
    %1076 = vmatpush1.msra.mxu0 0.0
    %1077 = vmatprep.subr.mxu0 0.0
    %1078 = vmatpush1.msra.mxu0 0.0
    %1079 = vmatprep.subr.mxu0 0.0
    %1080 = vmatpush1.msra.mxu0 0.0
    %1081 = vmatprep.subr.mxu0 0.0
    %1082 = vmatpush1.msra.mxu0 0.0
    %1083 = vmatprep.subr.mxu0 0.0
    %1084 = vmatpush1.msra.mxu0 0.0
    %1085 = vmatprep.subr.mxu0 0.0
    %1086 = vmatpush1.msra.mxu0 0.0
    %1087 = vmatprep.subr.mxu0 0.0
    %1088 = vmatpush1.msra.mxu0 0.0
    %1089 = vmatprep.subr.mxu0 0.0
    %1090 = vmatpush1.msra.mxu0 0.0
    %1091 = vmatprep.subr.mxu0 0.0
    %1092 = vmatpush1.msra.mxu0 0.0
    %1093 = vmatprep.subr.mxu0 0.0
    %1094 = vmatpush1.msra.mxu0 0.0
    %1095 = vmatprep.subr.mxu0 0.0
    %1096 = vmatpush1.msra.mxu0 %v1064
    %1097 = vmatprep.subr.mxu0 0.0
    %1098 = vmatpush1.msra.mxu0 %v1063
    %1099 = vmatprep.subr.mxu0 0.0
    %1100 = vmatpush1.msra.mxu0 %v1062
    %1101 = vmatprep.subr.mxu0 0.0
    %1102 = vmatpush1.msra.mxu0 %v1061
    %1103 = vmatprep.subr.mxu0 0.0
    %1104 = vmatpush2.msra.mxu0 0.0
    %1105 = vmatprep.subr.mxu0 0.0
    %1106 = vmatpush2.msra.mxu0 0.0
    %1107 = vmatprep.subr.mxu0 0.0
    %1108 = vmatpush2.msra.mxu0 0.0
    %1109 = vmatprep.subr.mxu0 0.0
    %1110 = vmatpush2.msra.mxu0 0.0
    %1111 = vmatprep.subr.mxu0 0.0
    %1112 = vmatpush2.msra.mxu0 0.0
    %1113 = vmatprep.subr.mxu0 0.0
    %1114 = vmatpush2.msra.mxu0 0.0
    %1115 = vmatprep.subr.mxu0 0.0
    %1116 = vmatpush2.msra.mxu0 0.0
    %1117 = vmatprep.subr.mxu0 0.0
    %1118 = vmatpush2.msra.mxu0 0.0
    %1119 = vmatprep.subr.mxu0 0.0
    %1120 = vmatpush2.msra.mxu0 0.0
    %1121 = vmatprep.subr.mxu0 0.0
    %1122 = vmatpush2.msra.mxu0 0.0
    %1123 = vmatprep.subr.mxu0 0.0
    %1124 = vmatpush2.msra.mxu0 0.0
    %1125 = vmatprep.subr.mxu0 0.0
    %1126 = vmatpush2.msra.mxu0 0.0
    %1127 = vmatprep.subr.mxu0 0.0
    %1128 = vmatpush2.msra.mxu0 0.0
    %1129 = vmatprep.subr.mxu0 0.0
    %1130 = vmatpush2.msra.mxu0 0.0
    %1131 = vmatprep.subr.mxu0 0.0
    %1132 = vmatpush2.msra.mxu0 0.0
    %1133 = vmatprep.subr.mxu0 0.0
    %1134 = vmatpush2.msra.mxu0 0.0
    %1135 = vmatprep.mubr.f32.mxu0 0.0
    %1136 = vmatmul.mubr.f32.gmra.mxu0 %v190
    %v1137 = vpop.f32.mrf.mxu0
    %v1138 = vadd.f32 0.0, %v1137
    %v1139 = vpop.f32.mrf.mxu0
    %1140 = vdwg.mxu0
    %v1141 = vadd.f32 %v1070, %v1138
    %v1142 = vxor.u32 %v1141, 2147483648
    %v1143 = vmul.f32 %v1142, 1.442695
    %v1144 = vpow.pop %v1143
    %v1145 = vadd.f32 %v1144, 1.0
    %v1146 = vrcp.pop %v1145
    %v1147 = vmul.f32 1.0, %v1146
    %v1149 = vlaneseq
    %v1150 = vshrl.u32 %v1149, 7
    %v1151 = vsub.s32 0, %v1150
    %v1152 = vrot.slane %v1065, %v1151
    %1153 = vrot.lane.b32.xlu0 %v1152, 64
    %v1154 = vpop.permute.xlu0 %1153
    %v1156 = vadd.f32 %v1138, %v1154
    %1158 = vrot.lane.b32.xlu0 %v1156, 64
    %v1159 = vpop.permute.xlu0 %1158
    %v1161 = vmul.f32 %v1147, %v1159
    %1163 = vrot.lane.b32.xlu0 %v1161, 64
    %v1164 = vpop.permute.xlu0 %1163
    %v1166 = vadd.f32 %v1070, %v1164
    %v1167 = vtanh.pop %v1166
    %v1168 = vsub.f32 1.0, %v1147
    %1170 = vrot.lane.b32.xlu0 %v1167, 96
    %v1171 = vpop.permute.xlu0 %1170
    %v1173 = vmul.f32 %v1168, %v1171
    %v1174 = vmul.f32 %v1147, 0.0
    %v1175 = vadd.f32 %v1173, %v1174
    %v1176 = vlaneseq
    %v1177 = vshrl.u32 %v1176, 7
    %v1178 = vsub.s32 1, %v1177
    %v1179 = vrot.slane %v1058, %v1178
    %v1180 = vadd.f32 %v985, %v1179
    %1182 = vrot.lane.b32.xlu0 %v1175, 96
    %v1183 = vpop.permute.xlu0 %1182
    %v1184 = vsel %vm95, %v1183, 0
    %1186 = vmatprep.subr.mxu0 0.0
    %1187 = vmatpush1.msra.mxu0 0.0
    %1188 = vmatprep.subr.mxu0 0.0
    %1189 = vmatpush1.msra.mxu0 0.0
    %1190 = vmatprep.subr.mxu0 0.0
    %1191 = vmatpush1.msra.mxu0 0.0
    %1192 = vmatprep.subr.mxu0 0.0
    %1193 = vmatpush1.msra.mxu0 0.0
    %1194 = vmatprep.subr.mxu0 0.0
    %1195 = vmatpush1.msra.mxu0 0.0
    %1196 = vmatprep.subr.mxu0 0.0
    %1197 = vmatpush1.msra.mxu0 0.0
    %1198 = vmatprep.subr.mxu0 0.0
    %1199 = vmatpush1.msra.mxu0 0.0
    %1200 = vmatprep.subr.mxu0 0.0
    %1201 = vmatpush1.msra.mxu0 0.0
    %1202 = vmatprep.subr.mxu0 0.0
    %1203 = vmatpush1.msra.mxu0 0.0
    %1204 = vmatprep.subr.mxu0 0.0
    %1205 = vmatpush1.msra.mxu0 0.0
    %1206 = vmatprep.subr.mxu0 0.0
    %1207 = vmatpush1.msra.mxu0 0.0
    %1208 = vmatprep.subr.mxu0 0.0
    %1209 = vmatpush1.msra.mxu0 0.0
    %1210 = vmatprep.subr.mxu0 0.0
    %1211 = vmatpush1.msra.mxu0 %v1064
    %1212 = vmatprep.subr.mxu0 0.0
    %1213 = vmatpush1.msra.mxu0 %v1063
    %1214 = vmatprep.subr.mxu0 0.0
    %1215 = vmatpush1.msra.mxu0 %v1062
    %1216 = vmatprep.subr.mxu0 0.0
    %1217 = vmatpush1.msra.mxu0 %v1061
    %1218 = vmatprep.subr.mxu0 0.0
    %1219 = vmatpush2.msra.mxu0 0.0
    %1220 = vmatprep.subr.mxu0 0.0
    %1221 = vmatpush2.msra.mxu0 0.0
    %1222 = vmatprep.subr.mxu0 0.0
    %1223 = vmatpush2.msra.mxu0 0.0
    %1224 = vmatprep.subr.mxu0 0.0
    %1225 = vmatpush2.msra.mxu0 0.0
    %1226 = vmatprep.subr.mxu0 0.0
    %1227 = vmatpush2.msra.mxu0 0.0
    %1228 = vmatprep.subr.mxu0 0.0
    %1229 = vmatpush2.msra.mxu0 0.0
    %1230 = vmatprep.subr.mxu0 0.0
    %1231 = vmatpush2.msra.mxu0 0.0
    %1232 = vmatprep.subr.mxu0 0.0
    %1233 = vmatpush2.msra.mxu0 0.0
    %1234 = vmatprep.subr.mxu0 0.0
    %1235 = vmatpush2.msra.mxu0 0.0
    %1236 = vmatprep.subr.mxu0 0.0
    %1237 = vmatpush2.msra.mxu0 0.0
    %1238 = vmatprep.subr.mxu0 0.0
    %1239 = vmatpush2.msra.mxu0 0.0
    %1240 = vmatprep.subr.mxu0 0.0
    %1241 = vmatpush2.msra.mxu0 0.0
    %1242 = vmatprep.subr.mxu0 0.0
    %1243 = vmatpush2.msra.mxu0 0.0
    %1244 = vmatprep.subr.mxu0 0.0
    %1245 = vmatpush2.msra.mxu0 0.0
    %1246 = vmatprep.subr.mxu0 0.0
    %1247 = vmatpush2.msra.mxu0 0.0
    %1248 = vmatprep.subr.mxu0 0.0
    %1249 = vmatpush2.msra.mxu0 0.0
    %1250 = vmatprep.mubr.f32.mxu0 0.0
    %1251 = vmatmul.mubr.f32.gmra.mxu0 %v1184
    %v1252 = vpop.f32.mrf.mxu0
    %v1253 = vadd.f32 0.0, %v1252
    %v1254 = vpop.f32.mrf.mxu0
    %1255 = vdwg.mxu0
    %v1256 = vadd.f32 %v1180, %v1253
    %v1257 = vxor.u32 %v1256, 2147483648
    %v1258 = vmul.f32 %v1257, 1.442695
    %v1259 = vpow.pop %v1258
    %v1260 = vadd.f32 %v1259, 1.0
    %v1261 = vrcp.pop %v1260
    %v1262 = vmul.f32 1.0, %v1261
    %v1263 = vadd.f32 %v1253, %v1154
    %1265 = vrot.lane.b32.xlu0 %v1263, 64
    %v1266 = vpop.permute.xlu0 %1265
    %v1268 = vmul.f32 %v1262, %v1266
    %1270 = vrot.lane.b32.xlu0 %v1268, 64
    %v1271 = vpop.permute.xlu0 %1270
    %v1273 = vadd.f32 %v1180, %v1271
    %v1274 = vtanh.pop %v1273
    %v1275 = vsub.f32 1.0, %v1262
    %1277 = vrot.lane.b32.xlu0 %v1274, 96
    %v1278 = vpop.permute.xlu0 %1277
    %v1280 = vmul.f32 %v1275, %v1278
    %v1281 = vmul.f32 %v1262, %v1175
    %v1282 = vadd.f32 %v1280, %v1281
    %v1283 = vld [vmem:[%s16] sm:$0xff]
    %v1284 = vld [vmem:[%s16 + $0x8] sm:$0xff]
    %v1285 = vld [vmem:[%s16 + $0x10] sm:$0xff]
    %v1286 = vld [vmem:[%s16 + $0x18] sm:$0xff]
    %v1287 = vld [vmem:[%s17] sm:$0x1]
    %v1289 = vlaneseq
    %v1290 = vshrl.u32 %v1289, 7
    %v1291 = vsub.s32 0, %v1290
    %v1292 = vrot.slane %v1287, %v1291
    %1295 = vrot.lane.b32.xlu0 %v1282, 96
    %v1296 = vpop.permute.xlu0 %1295
    %v1297 = vsel %vm95, %v1296, 0
    %1299 = vmatprep.subr.mxu0 0.0
    %1300 = vmatpush1.msra.mxu0 0.0
    %1301 = vmatprep.subr.mxu0 0.0
    %1302 = vmatpush1.msra.mxu0 0.0
    %1303 = vmatprep.subr.mxu0 0.0
    %1304 = vmatpush1.msra.mxu0 0.0
    %1305 = vmatprep.subr.mxu0 0.0
    %1306 = vmatpush1.msra.mxu0 0.0
    %1307 = vmatprep.subr.mxu0 0.0
    %1308 = vmatpush1.msra.mxu0 0.0
    %1309 = vmatprep.subr.mxu0 0.0
    %1310 = vmatpush1.msra.mxu0 0.0
    %1311 = vmatprep.subr.mxu0 0.0
    %1312 = vmatpush1.msra.mxu0 0.0
    %1313 = vmatprep.subr.mxu0 0.0
    %1314 = vmatpush1.msra.mxu0 0.0
    %1315 = vmatprep.subr.mxu0 0.0
    %1316 = vmatpush1.msra.mxu0 0.0
    %1317 = vmatprep.subr.mxu0 0.0
    %1318 = vmatpush1.msra.mxu0 0.0
    %1319 = vmatprep.subr.mxu0 0.0
    %1320 = vmatpush1.msra.mxu0 0.0
    %1321 = vmatprep.subr.mxu0 0.0
    %1322 = vmatpush1.msra.mxu0 0.0
    %1323 = vmatprep.subr.mxu0 0.0
    %1324 = vmatpush1.msra.mxu0 %v1286
    %1325 = vmatprep.subr.mxu0 0.0
    %1326 = vmatpush1.msra.mxu0 %v1285
    %1327 = vmatprep.subr.mxu0 0.0
    %1328 = vmatpush1.msra.mxu0 %v1284
    %1329 = vmatprep.subr.mxu0 0.0
    %1330 = vmatpush1.msra.mxu0 %v1283
    %1331 = vmatprep.subr.mxu0 0.0
    %1332 = vmatpush2.msra.mxu0 0.0
    %1333 = vmatprep.subr.mxu0 0.0
    %1334 = vmatpush2.msra.mxu0 0.0
    %1335 = vmatprep.subr.mxu0 0.0
    %1336 = vmatpush2.msra.mxu0 0.0
    %1337 = vmatprep.subr.mxu0 0.0
    %1338 = vmatpush2.msra.mxu0 0.0
    %1339 = vmatprep.subr.mxu0 0.0
    %1340 = vmatpush2.msra.mxu0 0.0
    %1341 = vmatprep.subr.mxu0 0.0
    %1342 = vmatpush2.msra.mxu0 0.0
    %1343 = vmatprep.subr.mxu0 0.0
    %1344 = vmatpush2.msra.mxu0 0.0
    %1345 = vmatprep.subr.mxu0 0.0
    %1346 = vmatpush2.msra.mxu0 0.0
    %1347 = vmatprep.subr.mxu0 0.0
    %1348 = vmatpush2.msra.mxu0 0.0
    %1349 = vmatprep.subr.mxu0 0.0
    %1350 = vmatpush2.msra.mxu0 0.0
    %1351 = vmatprep.subr.mxu0 0.0
    %1352 = vmatpush2.msra.mxu0 0.0
    %1353 = vmatprep.subr.mxu0 0.0
    %1354 = vmatpush2.msra.mxu0 0.0
    %1355 = vmatprep.subr.mxu0 0.0
    %1356 = vmatpush2.msra.mxu0 0.0
    %1357 = vmatprep.subr.mxu0 0.0
    %1358 = vmatpush2.msra.mxu0 0.0
    %1359 = vmatprep.subr.mxu0 0.0
    %1360 = vmatpush2.msra.mxu0 0.0
    %1361 = vmatprep.subr.mxu0 0.0
    %1362 = vmatpush2.msra.mxu0 0.0
    %1363 = vmatprep.mubr.f32.mxu0 0.0
    %1364 = vmatmul.mubr.f32.gmra.mxu0 %v1184
    %v1365 = vpop.f32.mrf.mxu0
    %v1366 = vadd.f32 %v1292, %v1365
    %v1367 = vpop.f32.mrf.mxu0
    %1368 = vmatprep.mubr.f32.mxu0 0.0
    %1369 = vmatmul.mubr.f32.gmra.mxu0 %v1297
    %v1370 = vpop.f32.mrf.mxu0
    %v1371 = vadd.f32 %v1292, %v1370
    %v1372 = vpop.f32.mrf.mxu0
    %1373 = vdwg.mxu0
    %1374 = vst [vmem:[#allocation7] sm:$0xff] %v1366
    %1375 = vst [vmem:[#allocation7 + $0x8] sm:$0xff] %v1371
    // Predicated region
    $region78: #{encode_forward.1} parent=1 // pred_check
      _
    $region79: #{encode_forward.1} parent=1 // pred_check_branch
      %1377 = sbr.rel (0) target = $region81
    $region80: #{encode_forward.1} parent=1 // pred_region
      %s1379 = ssub.s32 256, 256
      %1380 = vsyncadd [#allocation5], %s1379
      %s1381 = sshll.u32 [#allocation7], 4
      %s1382 = int_to_ptr.vmem [resolvable:$true] %s1381
      %1387 = dma.vmem_to_hbm [thread:$0]  %s1382, 256, %s18, [#allocation5], 128, 128, 8
    $region81: #{encode_forward.1} parent=1 // pred_fallthru
      _
    // Predicated region
    $region82: #{encode_forward.1} parent=1 // pred_check
      _
    $region83: #{encode_forward.1} parent=1 // pred_check_branch
      %1389 = sbr.rel (0) target = $region85
    $region84: #{encode_forward.1} parent=1 // pred_region
      %1390 = dma.done [#allocation5], 256
    $region85: #{encode_forward.1} parent=1 // pred_fallthru
      _
    %1391 = vsyncpa [#allocation5], 1
    %1392 = vsyncpa [#allocation6], 1

</llo_original>
